<compile_context>
chip_gen: v5e
topology: v5e:2x2
jax: 0.10.0
libtpu: 0.0.40
codegen_flags: <defaults>
</compile_context>

<pallas_src>
import functools

import numpy as np
import jax
import jax.numpy as jnp
from jax.experimental import pallas as pl
from jax.experimental.pallas import tpu as pltpu


# ----------------------------------------------------------------------------
# Blur weights (same table + silent fallback as get_blur_kernel_2d in PyTorch)
# ----------------------------------------------------------------------------
def _blur_kernel_1d(kernel_size: int) -> np.ndarray:
    if kernel_size == 1:
        k1d = [1.0]
    elif kernel_size == 3:
        k1d = [1.0, 2.0, 1.0]
    elif kernel_size == 5:
        k1d = [1.0, 4.0, 6.0, 4.0, 1.0]
    else:  # same silent fallback as the PyTorch reference
        k1d = [1.0, 2.0, 1.0]
    k = np.asarray(k1d, dtype=np.float64)
    # normalized 1D taps; outer product reproduces the normalized 2D kernel
    return (k / k.sum()).astype(np.float32)


# ----------------------------------------------------------------------------
# Kernel A: fused depthwise blur + stride-2 conv for one batch sample (NHWC)
# ----------------------------------------------------------------------------
def _blur_conv_kernel(x_ref, w_ref, o_ref, xpad_ref, bpad_ref, *,
                      H, W, C_in, C_out, Ho, Wo, bw, bK, cK, pb, pc, stride):
    # x_ref   : (1, H, W, C_in)        one input sample, channels-last
    # w_ref   : (cK*cK, C_in, C_out)   conv weights, one (C_in, C_out) mat per tap
    # o_ref   : (1, Ho, Wo, C_out)     conv output (f32, pre-norm)
    # xpad_ref: (H+2*pb, W+2*pb, C_in) zero-padded input scratch (VMEM)
    # bpad_ref: (H+2*pc, W+2*pc, C_in) zero-padded blurred scratch (VMEM)
    x = x_ref[0].astype(jnp.float32)

    # ---- separable blur, zero padding handled entirely in VMEM ----
    xpad_ref[...] = jnp.zeros_like(xpad_ref)
    xpad_ref[pb:pb + H, pb:pb + W, :] = x

    Hp = H + 2 * pb
    tmp = jnp.zeros((Hp, W, C_in), jnp.float32)
    for j in range(bK):                                  # horizontal pass
        tmp = tmp + bw[j] * xpad_ref[:, j:j + W, :]
    xb = jnp.zeros((H, W, C_in), jnp.float32)
    for i in range(bK):                                  # vertical pass
        xb = xb + bw[i] * tmp[i:i + H, :, :]

    # ---- stride-2 3x3 conv as 9 small im2col matmuls on the MXU ----
    bpad_ref[...] = jnp.zeros_like(bpad_ref)
    bpad_ref[pc:pc + H, pc:pc + W, :] = xb

    acc = jnp.zeros((Ho * Wo, C_out), jnp.float32)
    for ky in range(cK):
        for kx in range(cK):
            patch = bpad_ref[pl.ds(ky, Ho, stride), pl.ds(kx, Wo, stride), :]
            patch = patch.reshape(Ho * Wo, C_in)
            acc = acc + jnp.dot(patch, w_ref[ky * cK + kx],
                                preferred_element_type=jnp.float32)

    o_ref[0, :, :, :] = acc.reshape(Ho, Wo, C_out)


# ----------------------------------------------------------------------------
# Kernel B: BatchNorm affine (pre-folded scale/shift) + LeakyReLU, lane-dense
# ----------------------------------------------------------------------------
def _bn_act_kernel(x_ref, s_ref, b_ref, o_ref, *, negative_slope):
    t = x_ref[...] * s_ref[...] + b_ref[...]
    o_ref[...] = jnp.where(t >= 0, t, negative_slope * t).astype(o_ref.dtype)


# ----------------------------------------------------------------------------
# Wrapper: full DownsampleBlock forward
# ----------------------------------------------------------------------------
def downsample_block(x, conv_w, gamma, beta, *,
                     blur_kernel_size=3, conv_stride=2, conv_padding=1,
                     eps=1e-5, negative_slope=0.2):
    """x: (N, C_in, H, W) NCHW.  conv_w: (C_out, C_in, k, k).  Returns NCHW."""
    N, C_in, H, W = x.shape
    C_out, C_in_w, cK, cK2 = conv_w.shape
    assert C_in_w == C_in and cK == cK2

    Ho = (H + 2 * conv_padding - cK) // conv_stride + 1
    Wo = (W + 2 * conv_padding - cK) // conv_stride + 1

    if blur_kernel_size > 0:
        bw = tuple(float(v) for v in _blur_kernel_1d(blur_kernel_size))
    else:
        bw = (1.0,)                     # apply_blur = False -> identity blur
    bK = len(bw)
    pb = bK // 2
    pc = conv_padding

    # Glue: channels-last layout for MXU-friendly conv; weights as per-tap mats.
    x_nhwc = jnp.transpose(x, (0, 2, 3, 1))
    w_taps = jnp.transpose(conv_w, (2, 3, 1, 0)).reshape(
        cK * cK, C_in, C_out).astype(jnp.float32)

    conv_out = pl.pallas_call(
        functools.partial(_blur_conv_kernel, H=H, W=W, C_in=C_in, C_out=C_out,
                          Ho=Ho, Wo=Wo, bw=bw, bK=bK, cK=cK, pb=pb, pc=pc,
                          stride=conv_stride),
        out_shape=jax.ShapeDtypeStruct((N, Ho, Wo, C_out), jnp.float32),
        grid=(N,),
        in_specs=[
            pl.BlockSpec((1, H, W, C_in), lambda n: (n, 0, 0, 0)),
            pl.BlockSpec((cK * cK, C_in, C_out), lambda n: (0, 0, 0)),
        ],
        out_specs=pl.BlockSpec((1, Ho, Wo, C_out), lambda n: (n, 0, 0, 0)),
        scratch_shapes=[
            pltpu.VMEM((H + 2 * pb, W + 2 * pb, C_in), jnp.float32),
            pltpu.VMEM((H + 2 * pc, W + 2 * pc, C_in), jnp.float32),
        ],
        compiler_params=pltpu.CompilerParams(
            dimension_semantics=("parallel",),
            vmem_limit_bytes=32 * 1024 * 1024,
        ),
    )(x_nhwc, w_taps)

    # Glue: training-mode BatchNorm2d batch statistics (biased variance) and
    # folding of (mean, var, gamma, beta) into a single scale/shift per channel.
    # TODO(synk): running-stat updates / SyncBatchNorm all-reduce are training
    # side effects, not part of the forward output; not implemented here.
    mean = jnp.mean(conv_out, axis=(0, 1, 2))
    var = jnp.var(conv_out, axis=(0, 1, 2))
    inv = gamma.astype(jnp.float32) * jax.lax.rsqrt(var + eps)
    shift = beta.astype(jnp.float32) - mean * inv

    # Lane-dense flattened layout: last dim = Ho*Wo*C_out (multiple of 128).
    M = Ho * Wo * C_out
    conv_flat = conv_out.reshape(N, 1, M)
    scale_b = jnp.tile(inv, Ho * Wo).reshape(1, 1, M)
    shift_b = jnp.tile(shift, Ho * Wo).reshape(1, 1, M)

    y_flat = pl.pallas_call(
        functools.partial(_bn_act_kernel, negative_slope=negative_slope),
        out_shape=jax.ShapeDtypeStruct((N, 1, M), x.dtype),
        grid=(N,),
        in_specs=[
            pl.BlockSpec((1, 1, M), lambda n: (n, 0, 0)),
            pl.BlockSpec((1, 1, M), lambda n: (0, 0, 0)),
            pl.BlockSpec((1, 1, M), lambda n: (0, 0, 0)),
        ],
        out_specs=pl.BlockSpec((1, 1, M), lambda n: (n, 0, 0)),
        compiler_params=pltpu.CompilerParams(
            dimension_semantics=("parallel",),
            vmem_limit_bytes=32 * 1024 * 1024,
        ),
    )(conv_flat, scale_b, shift_b)

    return y_flat.reshape(N, Ho, Wo, C_out).transpose(0, 3, 1, 2)


# ----------------------------------------------------------------------------
# Pure-JAX reference (matches the PyTorch module's forward in training mode)
# ----------------------------------------------------------------------------
def _reference_downsample_block(x, conv_w, gamma, beta, *,
                                blur_kernel_size=3, eps=1e-5,
                                negative_slope=0.2):
    N, C, H, W = x.shape
    k1 = jnp.asarray(_blur_kernel_1d(blur_kernel_size), dtype=jnp.float32)
    k2 = jnp.outer(k1, k1)
    pb = blur_kernel_size // 2
    bk = jnp.broadcast_to(k2[None, None],
                          (C, 1, blur_kernel_size, blur_kernel_size))
    xb = jax.lax.conv_general_dilated(
        x, bk.astype(x.dtype), (1, 1), [(pb, pb), (pb, pb)],
        feature_group_count=C, dimension_numbers=("NCHW", "OIHW", "NCHW"),
        precision=jax.lax.Precision.HIGHEST)
    xc = jax.lax.conv_general_dilated(
        xb, conv_w.astype(x.dtype), (2, 2), [(1, 1), (1, 1)],
        dimension_numbers=("NCHW", "OIHW", "NCHW"),
        precision=jax.lax.Precision.HIGHEST)
    mean = jnp.mean(xc, axis=(0, 2, 3), keepdims=True)
    var = jnp.var(xc, axis=(0, 2, 3), keepdims=True)
    xn = (xc - mean) * jax.lax.rsqrt(var + eps)
    xn = xn * gamma[None, :, None, None] + beta[None, :, None, None]
    return jnp.where(xn >= 0, xn, negative_slope * xn)


if __name__ == "__main__":
    key = jax.random.PRNGKey(0)
    kx, kw, kg, kb = jax.random.split(key, 4)

    N, C_in, H, W = 2, 32, 16, 16
    C_out = 64

    x = jax.random.normal(kx, (N, C_in, H, W), dtype=jnp.float32)
    conv_w = 0.05 * jax.random.normal(kw, (C_out, C_in, 3, 3), dtype=jnp.float32)
    gamma = 1.0 + 0.1 * jax.random.normal(kg, (C_out,), dtype=jnp.float32)
    beta = 0.1 * jax.random.normal(kb, (C_out,), dtype=jnp.float32)

    y = jax.block_until_ready(downsample_block(x, conv_w, gamma, beta))
    y_ref = jax.block_until_ready(
        _reference_downsample_block(x, conv_w, gamma, beta))

    assert y.shape == (N, C_out, H // 2, W // 2), y.shape
    err = float(jnp.max(jnp.abs(y - y_ref)))
    assert err < 1e-3, f"max abs err {err}"
    print("KERNEL_OK")
</pallas_src>

<mosaic_0001>
module attributes {stable_mosaic.version = 11 : i64} {
  func.func @_blur_conv_kernel(%arg0: i32, %arg1: memref<1x16x16x32xf32, #tpu.memory_space<vmem>>, %arg2: memref<9x32x64xf32, #tpu.memory_space<vmem>>, %arg3: memref<1x8x8x64xf32, #tpu.memory_space<vmem>>, %arg4: memref<18x18x32xf32, #tpu.memory_space<vmem>>, %arg5: memref<18x18x32xf32, #tpu.memory_space<vmem>>) attributes {dimension_semantics = [#tpu.dimension_semantics<parallel>], iteration_bounds = array<i64: 2>, scalar_prefetch = 0 : i64, scratch_operands = 2 : i64, tpu.core_type = #tpu.core_type<tc>, window_params = [{transform_indices = @transform_0, window_bounds = array<i64: 1, 16, 16, 32>}, {pipeline_mode = #tpu.pipeline_mode<synchronous>, transform_indices = @transform_1, window_bounds = array<i64: 9, 32, 64>}, {transform_indices = @transform_2, window_bounds = array<i64: 1, 8, 8, 64>}]} {
    %c0 = arith.constant 0 : index
    %c0_0 = arith.constant 0 : index
    %c0_1 = arith.constant 0 : index
    %c0_2 = arith.constant 0 : index
    %0 = vector.load %arg1[%c0, %c0_0, %c0_1, %c0_2] : memref<1x16x16x32xf32, #tpu.memory_space<vmem>>, vector<1x16x16x32xf32>
    %1 = vector.shape_cast %0 : vector<1x16x16x32xf32> to vector<16x16x32xf32>
    %cst = arith.constant 0.000000e+00 : f32
    %2 = vector.broadcast %cst : f32 to vector<18x18x32xf32>
    %c0_3 = arith.constant 0 : index
    %c0_4 = arith.constant 0 : index
    %c0_5 = arith.constant 0 : index
    %3 = vector.load %arg4[%c0_3, %c0_4, %c0_5] : memref<18x18x32xf32, #tpu.memory_space<vmem>>, vector<18x18x32xf32>
    tpu.vector_store %arg4[%c0_3, %c0_4, %c0_5], %2 {strides = array<i32>} : memref<18x18x32xf32, #tpu.memory_space<vmem>>, vector<18x18x32xf32>,
    %c1 = arith.constant 1 : index
    %c1_6 = arith.constant 1 : index
    %c0_7 = arith.constant 0 : index
    %4 = vector.load %arg4[%c1, %c1_6, %c0_7] : memref<18x18x32xf32, #tpu.memory_space<vmem>>, vector<16x16x32xf32>
    tpu.vector_store %arg4[%c1, %c1_6, %c0_7], %1 {strides = array<i32>} : memref<18x18x32xf32, #tpu.memory_space<vmem>>, vector<16x16x32xf32>,
    %cst_8 = arith.constant 0.000000e+00 : f32
    %5 = vector.broadcast %cst_8 : f32 to vector<18x16x32xf32>
    %c0_9 = arith.constant 0 : index
    %c0_10 = arith.constant 0 : index
    %c0_11 = arith.constant 0 : index
    %6 = vector.load %arg4[%c0_9, %c0_10, %c0_11] : memref<18x18x32xf32, #tpu.memory_space<vmem>>, vector<18x16x32xf32>
    %cst_12 = arith.constant 2.500000e-01 : f32
    %7 = vector.broadcast %cst_12 : f32 to vector<18x16x32xf32>
    %8 = arith.mulf %7, %6 : vector<18x16x32xf32>
    %9 = arith.addf %5, %8 : vector<18x16x32xf32>
    %c0_13 = arith.constant 0 : index
    %c1_14 = arith.constant 1 : index
    %c0_15 = arith.constant 0 : index
    %10 = vector.load %arg4[%c0_13, %c1_14, %c0_15] : memref<18x18x32xf32, #tpu.memory_space<vmem>>, vector<18x16x32xf32>
    %cst_16 = arith.constant 5.000000e-01 : f32
    %11 = vector.broadcast %cst_16 : f32 to vector<18x16x32xf32>
    %12 = arith.mulf %11, %10 : vector<18x16x32xf32>
    %13 = arith.addf %9, %12 : vector<18x16x32xf32>
    %c0_17 = arith.constant 0 : index
    %c2 = arith.constant 2 : index
    %c0_18 = arith.constant 0 : index
    %14 = vector.load %arg4[%c0_17, %c2, %c0_18] : memref<18x18x32xf32, #tpu.memory_space<vmem>>, vector<18x16x32xf32>
    %cst_19 = arith.constant 2.500000e-01 : f32
    %15 = vector.broadcast %cst_19 : f32 to vector<18x16x32xf32>
    %16 = arith.mulf %15, %14 : vector<18x16x32xf32>
    %17 = arith.addf %13, %16 : vector<18x16x32xf32>
    %cst_20 = arith.constant 0.000000e+00 : f32
    %18 = vector.broadcast %cst_20 : f32 to vector<16x16x32xf32>
    %19 = vector.extract_strided_slice %17 {offsets = [0, 0, 0], sizes = [16, 16, 32], strides = [1, 1, 1]} : vector<18x16x32xf32> to vector<16x16x32xf32>
    %cst_21 = arith.constant 2.500000e-01 : f32
    %20 = vector.broadcast %cst_21 : f32 to vector<16x16x32xf32>
    %21 = arith.mulf %20, %19 : vector<16x16x32xf32>
    %22 = arith.addf %18, %21 : vector<16x16x32xf32>
    %23 = vector.extract_strided_slice %17 {offsets = [1, 0, 0], sizes = [16, 16, 32], strides = [1, 1, 1]} : vector<18x16x32xf32> to vector<16x16x32xf32>
    %cst_22 = arith.constant 5.000000e-01 : f32
    %24 = vector.broadcast %cst_22 : f32 to vector<16x16x32xf32>
    %25 = arith.mulf %24, %23 : vector<16x16x32xf32>
    %26 = arith.addf %22, %25 : vector<16x16x32xf32>
    %27 = vector.extract_strided_slice %17 {offsets = [2, 0, 0], sizes = [16, 16, 32], strides = [1, 1, 1]} : vector<18x16x32xf32> to vector<16x16x32xf32>
    %cst_23 = arith.constant 2.500000e-01 : f32
    %28 = vector.broadcast %cst_23 : f32 to vector<16x16x32xf32>
    %29 = arith.mulf %28, %27 : vector<16x16x32xf32>
    %30 = arith.addf %26, %29 : vector<16x16x32xf32>
    %cst_24 = arith.constant 0.000000e+00 : f32
    %31 = vector.broadcast %cst_24 : f32 to vector<18x18x32xf32>
    %c0_25 = arith.constant 0 : index
    %c0_26 = arith.constant 0 : index
    %c0_27 = arith.constant 0 : index
    %32 = vector.load %arg5[%c0_25, %c0_26, %c0_27] : memref<18x18x32xf32, #tpu.memory_space<vmem>>, vector<18x18x32xf32>
    tpu.vector_store %arg5[%c0_25, %c0_26, %c0_27], %31 {strides = array<i32>} : memref<18x18x32xf32, #tpu.memory_space<vmem>>, vector<18x18x32xf32>,
    %c1_28 = arith.constant 1 : index
    %c1_29 = arith.constant 1 : index
    %c0_30 = arith.constant 0 : index
    %33 = vector.load %arg5[%c1_28, %c1_29, %c0_30] : memref<18x18x32xf32, #tpu.memory_space<vmem>>, vector<16x16x32xf32>
    tpu.vector_store %arg5[%c1_28, %c1_29, %c0_30], %30 {strides = array<i32>} : memref<18x18x32xf32, #tpu.memory_space<vmem>>, vector<16x16x32xf32>,
    %cst_31 = arith.constant 0.000000e+00 : f32
    %34 = vector.broadcast %cst_31 : f32 to vector<64x64xf32>
    %c0_32 = arith.constant 0 : index
    %c0_33 = arith.constant 0 : index
    %c0_34 = arith.constant 0 : index
    %35 = tpu.strided_load %arg5[%c0_32, %c0_33, %c0_34] {strides = array<i32: 2, 2, 1>} : memref<18x18x32xf32, #tpu.memory_space<vmem>>, vector<8x8x32xf32>
    %36 = vector.shape_cast %35 : vector<8x8x32xf32> to vector<64x32xf32>
    %c0_35 = arith.constant 0 : index
    %c0_36 = arith.constant 0 : index
    %c0_37 = arith.constant 0 : index
    %37 = vector.load %arg2[%c0_35, %c0_36, %c0_37] : memref<9x32x64xf32, #tpu.memory_space<vmem>>, vector<1x32x64xf32>
    %38 = vector.shape_cast %37 : vector<1x32x64xf32> to vector<32x64xf32>
    %cst_38 = arith.constant dense<0.000000e+00> : vector<64x64xf32>
    %39 = tpu.matmul %36, %38, %cst_38 {dimension_numbers = #tpu.dot_dimension_numbers<[1], [0], [0], [1], [0, 0, 1, 1], [], []>} : vector<64x32xf32>, vector<32x64xf32>, vector<64x64xf32> -> vector<64x64xf32>
    %40 = arith.addf %34, %39 : vector<64x64xf32>
    %c0_39 = arith.constant 0 : index
    %c1_40 = arith.constant 1 : index
    %c0_41 = arith.constant 0 : index
    %41 = tpu.strided_load %arg5[%c0_39, %c1_40, %c0_41] {strides = array<i32: 2, 2, 1>} : memref<18x18x32xf32, #tpu.memory_space<vmem>>, vector<8x8x32xf32>
    %42 = vector.shape_cast %41 : vector<8x8x32xf32> to vector<64x32xf32>
    %c1_42 = arith.constant 1 : index
    %c0_43 = arith.constant 0 : index
    %c0_44 = arith.constant 0 : index
    %43 = vector.load %arg2[%c1_42, %c0_43, %c0_44] : memref<9x32x64xf32, #tpu.memory_space<vmem>>, vector<1x32x64xf32>
    %44 = vector.shape_cast %43 : vector<1x32x64xf32> to vector<32x64xf32>
    %cst_45 = arith.constant dense<0.000000e+00> : vector<64x64xf32>
    %45 = tpu.matmul %42, %44, %cst_45 {dimension_numbers = #tpu.dot_dimension_numbers<[1], [0], [0], [1], [0, 0, 1, 1], [], []>} : vector<64x32xf32>, vector<32x64xf32>, vector<64x64xf32> -> vector<64x64xf32>
    %46 = arith.addf %40, %45 : vector<64x64xf32>
    %c0_46 = arith.constant 0 : index
    %c2_47 = arith.constant 2 : index
    %c0_48 = arith.constant 0 : index
    %47 = tpu.strided_load %arg5[%c0_46, %c2_47, %c0_48] {strides = array<i32: 2, 2, 1>} : memref<18x18x32xf32, #tpu.memory_space<vmem>>, vector<8x8x32xf32>
    %48 = vector.shape_cast %47 : vector<8x8x32xf32> to vector<64x32xf32>
    %c2_49 = arith.constant 2 : index
    %c0_50 = arith.constant 0 : index
    %c0_51 = arith.constant 0 : index
    %49 = vector.load %arg2[%c2_49, %c0_50, %c0_51] : memref<9x32x64xf32, #tpu.memory_space<vmem>>, vector<1x32x64xf32>
    %50 = vector.shape_cast %49 : vector<1x32x64xf32> to vector<32x64xf32>
    %cst_52 = arith.constant dense<0.000000e+00> : vector<64x64xf32>
    %51 = tpu.matmul %48, %50, %cst_52 {dimension_numbers = #tpu.dot_dimension_numbers<[1], [0], [0], [1], [0, 0, 1, 1], [], []>} : vector<64x32xf32>, vector<32x64xf32>, vector<64x64xf32> -> vector<64x64xf32>
    %52 = arith.addf %46, %51 : vector<64x64xf32>
    %c1_53 = arith.constant 1 : index
    %c0_54 = arith.constant 0 : index
    %c0_55 = arith.constant 0 : index
    %53 = tpu.strided_load %arg5[%c1_53, %c0_54, %c0_55] {strides = array<i32: 2, 2, 1>} : memref<18x18x32xf32, #tpu.memory_space<vmem>>, vector<8x8x32xf32>
    %54 = vector.shape_cast %53 : vector<8x8x32xf32> to vector<64x32xf32>
    %c3 = arith.constant 3 : index
    %c0_56 = arith.constant 0 : index
    %c0_57 = arith.constant 0 : index
    %55 = vector.load %arg2[%c3, %c0_56, %c0_57] : memref<9x32x64xf32, #tpu.memory_space<vmem>>, vector<1x32x64xf32>
    %56 = vector.shape_cast %55 : vector<1x32x64xf32> to vector<32x64xf32>
    %cst_58 = arith.constant dense<0.000000e+00> : vector<64x64xf32>
    %57 = tpu.matmul %54, %56, %cst_58 {dimension_numbers = #tpu.dot_dimension_numbers<[1], [0], [0], [1], [0, 0, 1, 1], [], []>} : vector<64x32xf32>, vector<32x64xf32>, vector<64x64xf32> -> vector<64x64xf32>
    %58 = arith.addf %52, %57 : vector<64x64xf32>
    %c1_59 = arith.constant 1 : index
    %c1_60 = arith.constant 1 : index
    %c0_61 = arith.constant 0 : index
    %59 = tpu.strided_load %arg5[%c1_59, %c1_60, %c0_61] {strides = array<i32: 2, 2, 1>} : memref<18x18x32xf32, #tpu.memory_space<vmem>>, vector<8x8x32xf32>
    %60 = vector.shape_cast %59 : vector<8x8x32xf32> to vector<64x32xf32>
    %c4 = arith.constant 4 : index
    %c0_62 = arith.constant 0 : index
    %c0_63 = arith.constant 0 : index
    %61 = vector.load %arg2[%c4, %c0_62, %c0_63] : memref<9x32x64xf32, #tpu.memory_space<vmem>>, vector<1x32x64xf32>
    %62 = vector.shape_cast %61 : vector<1x32x64xf32> to vector<32x64xf32>
    %cst_64 = arith.constant dense<0.000000e+00> : vector<64x64xf32>
    %63 = tpu.matmul %60, %62, %cst_64 {dimension_numbers = #tpu.dot_dimension_numbers<[1], [0], [0], [1], [0, 0, 1, 1], [], []>} : vector<64x32xf32>, vector<32x64xf32>, vector<64x64xf32> -> vector<64x64xf32>
    %64 = arith.addf %58, %63 : vector<64x64xf32>
    %c1_65 = arith.constant 1 : index
    %c2_66 = arith.constant 2 : index
    %c0_67 = arith.constant 0 : index
    %65 = tpu.strided_load %arg5[%c1_65, %c2_66, %c0_67] {strides = array<i32: 2, 2, 1>} : memref<18x18x32xf32, #tpu.memory_space<vmem>>, vector<8x8x32xf32>
    %66 = vector.shape_cast %65 : vector<8x8x32xf32> to vector<64x32xf32>
    %c5 = arith.constant 5 : index
    %c0_68 = arith.constant 0 : index
    %c0_69 = arith.constant 0 : index
    %67 = vector.load %arg2[%c5, %c0_68, %c0_69] : memref<9x32x64xf32, #tpu.memory_space<vmem>>, vector<1x32x64xf32>
    %68 = vector.shape_cast %67 : vector<1x32x64xf32> to vector<32x64xf32>
    %cst_70 = arith.constant dense<0.000000e+00> : vector<64x64xf32>
    %69 = tpu.matmul %66, %68, %cst_70 {dimension_numbers = #tpu.dot_dimension_numbers<[1], [0], [0], [1], [0, 0, 1, 1], [], []>} : vector<64x32xf32>, vector<32x64xf32>, vector<64x64xf32> -> vector<64x64xf32>
    %70 = arith.addf %64, %69 : vector<64x64xf32>
    %c2_71 = arith.constant 2 : index
    %c0_72 = arith.constant 0 : index
    %c0_73 = arith.constant 0 : index
    %71 = tpu.strided_load %arg5[%c2_71, %c0_72, %c0_73] {strides = array<i32: 2, 2, 1>} : memref<18x18x32xf32, #tpu.memory_space<vmem>>, vector<8x8x32xf32>
    %72 = vector.shape_cast %71 : vector<8x8x32xf32> to vector<64x32xf32>
    %c6 = arith.constant 6 : index
    %c0_74 = arith.constant 0 : index
    %c0_75 = arith.constant 0 : index
    %73 = vector.load %arg2[%c6, %c0_74, %c0_75] : memref<9x32x64xf32, #tpu.memory_space<vmem>>, vector<1x32x64xf32>
    %74 = vector.shape_cast %73 : vector<1x32x64xf32> to vector<32x64xf32>
    %cst_76 = arith.constant dense<0.000000e+00> : vector<64x64xf32>
    %75 = tpu.matmul %72, %74, %cst_76 {dimension_numbers = #tpu.dot_dimension_numbers<[1], [0], [0], [1], [0, 0, 1, 1], [], []>} : vector<64x32xf32>, vector<32x64xf32>, vector<64x64xf32> -> vector<64x64xf32>
    %76 = arith.addf %70, %75 : vector<64x64xf32>
    %c2_77 = arith.constant 2 : index
    %c1_78 = arith.constant 1 : index
    %c0_79 = arith.constant 0 : index
    %77 = tpu.strided_load %arg5[%c2_77, %c1_78, %c0_79] {strides = array<i32: 2, 2, 1>} : memref<18x18x32xf32, #tpu.memory_space<vmem>>, vector<8x8x32xf32>
    %78 = vector.shape_cast %77 : vector<8x8x32xf32> to vector<64x32xf32>
    %c7 = arith.constant 7 : index
    %c0_80 = arith.constant 0 : index
    %c0_81 = arith.constant 0 : index
    %79 = vector.load %arg2[%c7, %c0_80, %c0_81] : memref<9x32x64xf32, #tpu.memory_space<vmem>>, vector<1x32x64xf32>
    %80 = vector.shape_cast %79 : vector<1x32x64xf32> to vector<32x64xf32>
    %cst_82 = arith.constant dense<0.000000e+00> : vector<64x64xf32>
    %81 = tpu.matmul %78, %80, %cst_82 {dimension_numbers = #tpu.dot_dimension_numbers<[1], [0], [0], [1], [0, 0, 1, 1], [], []>} : vector<64x32xf32>, vector<32x64xf32>, vector<64x64xf32> -> vector<64x64xf32>
    %82 = arith.addf %76, %81 : vector<64x64xf32>
    %c2_83 = arith.constant 2 : index
    %c2_84 = arith.constant 2 : index
    %c0_85 = arith.constant 0 : index
    %83 = tpu.strided_load %arg5[%c2_83, %c2_84, %c0_85] {strides = array<i32: 2, 2, 1>} : memref<18x18x32xf32, #tpu.memory_space<vmem>>, vector<8x8x32xf32>
    %84 = vector.shape_cast %83 : vector<8x8x32xf32> to vector<64x32xf32>
    %c8 = arith.constant 8 : index
    %c0_86 = arith.constant 0 : index
    %c0_87 = arith.constant 0 : index
    %85 = vector.load %arg2[%c8, %c0_86, %c0_87] : memref<9x32x64xf32, #tpu.memory_space<vmem>>, vector<1x32x64xf32>
    %86 = vector.shape_cast %85 : vector<1x32x64xf32> to vector<32x64xf32>
    %cst_88 = arith.constant dense<0.000000e+00> : vector<64x64xf32>
    %87 = tpu.matmul %84, %86, %cst_88 {dimension_numbers = #tpu.dot_dimension_numbers<[1], [0], [0], [1], [0, 0, 1, 1], [], []>} : vector<64x32xf32>, vector<32x64xf32>, vector<64x64xf32> -> vector<64x64xf32>
    %88 = arith.addf %82, %87 : vector<64x64xf32>
    %89 = vector.shape_cast %88 : vector<64x64xf32> to vector<8x8x64xf32>
    %c0_89 = arith.constant 0 : index
    %c0_90 = arith.constant 0 : index
    %c0_91 = arith.constant 0 : index
    %c0_92 = arith.constant 0 : index
    %90 = vector.load %arg3[%c0_89, %c0_90, %c0_91, %c0_92] : memref<1x8x8x64xf32, #tpu.memory_space<vmem>>, vector<1x8x8x64xf32>
    %91 = vector.shape_cast %90 : vector<1x8x8x64xf32> to vector<8x8x64xf32>
    %92 = vector.shape_cast %89 : vector<8x8x64xf32> to vector<1x8x8x64xf32>
    tpu.vector_store %arg3[%c0_89, %c0_90, %c0_91, %c0_92], %92 {strides = array<i32>} : memref<1x8x8x64xf32, #tpu.memory_space<vmem>>, vector<1x8x8x64xf32>,
    return
  }
  func.func @transform_0(%arg0: i32) -> (i32, i32, i32, i32) {
    %c0_i32 = arith.constant 0 : i32
    %c0_i32_0 = arith.constant 0 : i32
    %c0_i32_1 = arith.constant 0 : i32
    %c0_i32_2 = arith.constant 0 : i32
    return %arg0, %c0_i32, %c0_i32_0, %c0_i32_1 : i32, i32, i32, i32
  }
  func.func @transform_1(%arg0: i32) -> (i32, i32, i32) {
    %c0_i32 = arith.constant 0 : i32
    %c0_i32_0 = arith.constant 0 : i32
    %c0_i32_1 = arith.constant 0 : i32
    %c0_i32_2 = arith.constant 0 : i32
    return %c0_i32, %c0_i32_0, %c0_i32_1 : i32, i32, i32
  }
  func.func @transform_2(%arg0: i32) -> (i32, i32, i32, i32) {
    %c0_i32 = arith.constant 0 : i32
    %c0_i32_0 = arith.constant 0 : i32
    %c0_i32_1 = arith.constant 0 : i32
    %c0_i32_2 = arith.constant 0 : i32
    return %arg0, %c0_i32, %c0_i32_0, %c0_i32_1 : i32, i32, i32, i32
  }
}

</mosaic_0001>

<llo_original>
// kernel: tpu_custom_call.1
$region0: #{tpu_custom_call.1}
  #allocation0 [shape = 'u32[]', space=smem, size = 0x4, offset = 0x4, fixed_abs, tag = 'smem constant byte address 0x4 - core index']
  #allocation1 [shape = 'u32[72,128]{1,0:T(1,128)}', space=vmem, size = 0x9000, scoped, tag = 'internal scratch']
  #allocation2 [shape = 'f32[18,18,32]{2,1,0:T(8,128)}', space=vmem, size = 0x36000, scoped, tag = 'scratch operand']
  #allocation3 [shape = 'f32[18,18,32]{2,1,0:T(8,128)}', space=vmem, size = 0x36000, scoped, tag = 'scratch operand']
  %s0 = inlined_call_operand.hbm [shape: f32[2,16,16,32], index: 0, kind: input, shape index: {}]
  %s1 = inlined_call_operand.hbm [shape: f32[9,32,64], index: 1, kind: input, shape index: {}]
  %s2 = inlined_call_operand.hbm [shape: f32[2,8,8,64], index: 2, kind: output, shape index: {}]
  %s3 = sld [smem:[#allocation0]]
  $region49: #{tpu_custom_call.1} parent=0
    _
  %s5 = ssub.s32 1, %s3
  %s6 = scalar_select 0, %s5, %s3
  $region1: #{tpu_custom_call.1} parent=0
    #allocation4 [shape = 'u8[262144]{0}', space=vmem, size = 0x40000, scoped, tag = 'input window, operand 0']
    #allocation5 [shape = 's32[2]{0}', space=sflag, size = 0x8, scoped, tag = 'scoped memory for tpu_custom_call.1']
    #allocation6 [shape = 's32[2]{0}', space=sflag, size = 0x8, scoped, tag = 'scoped memory for tpu_custom_call.1']
    #allocation7 [shape = 'u8[147456]{0}', space=vmem, size = 0x24000, scoped, tag = 'input window, operand 1, single buffered']
    #allocation8 [shape = 's32[1]{0}', space=sflag, size = 0x4, scoped, tag = 'scoped memory for tpu_custom_call.1']
    #allocation9 [shape = 'u8[65536]{0}', space=vmem, size = 0x10000, scoped, tag = 'output window, operand 0']
    %7 = vsyncpa [#allocation5], 0
    %s8 = scalar_lea.sflag [#allocation5], 1
    %9 = vsyncpa %s8, 0
    %10 = vsyncpa [#allocation8], 0
    %11 = vsyncpa [#allocation6], 0
    %s12 = scalar_lea.sflag [#allocation6], 1
    %13 = vsyncpa %s12, 0
    loop: start=0, step=1, limit=4
    $region2: #{tpu_custom_call.1} parent=1 // loop_pre_header
      _
    $region3: #{tpu_custom_call.1} parent=1 // loop_header
      %s15 = sphi 0, %s19
      %p16 = scmp.ge.s32.totalorder %s15, 4
      %s25 = sphi 0, %s27
      %s28 = sphi 0, %s25
      %s29 = sphi 0, %s28
      %s45 = sphi 0, %s29
      %s49 = sphi 0, %s49
      %s51 = sphi 0, %s49
      %s52 = sphi 0, %s51
      %s66 = sphi 0, %s52
      %s72 = sphi 0, %s74
      %s75 = sphi 0, %s72
      %s76 = sphi 0, %s75
      %s92 = sphi 0, %s76
    $region4: #{tpu_custom_call.1} parent=1 // loop_header_branch
      %18 = sbr.rel (%p16) target = $region8
    $region5: #{tpu_custom_call.1} parent=1 // loop_body
      %s20 = ssub.s32 %s15, 1
      %s21 = ssub.s32 %s15, 2
      %s22 = sadd.s32 %s15, 1
      %s23 = ssub.s32 %s15, %s22
      %p24 = scmp.eq.s32.totalorder %s23, 0
      %s26 = sadd.s32 %s25, 1
      %s27 = scalar_select %p24, %s25, %s26
      %p30 = pneg %p24
      %p31 = scmp.eq.s32.totalorder %s15, 1
      %p32 = por %p30, %p31
      %p33 = scmp.ne.s32.totalorder %s25, %s28
      %p34 = scmp.eq.s32.totalorder %s15, 0
      %p35 = por %p33, %p34
      %p36 = scmp.ne.s32.totalorder %s25, %s28
      %p37 = scmp.eq.s32.totalorder %s20, 1
      %p38 = por %p36, %p37
      %p39 = scmp.ne.s32.totalorder %s28, %s29
      %p40 = scmp.eq.s32.totalorder %s20, 0
      %p41 = por %p39, %p40
      %p42 = scmp.ne.s32.totalorder %s28, %s29
      %p43 = scmp.eq.s32.totalorder %s21, 1
      %p44 = por %p42, %p43
      %p46 = scmp.ne.s32.totalorder %s29, %s45
      %p47 = scmp.eq.s32.totalorder %s21, 0
      %p48 = por %p46, %p47
      %s50 = sadd.s32 %s49, 1
      %p53 = scmp.eq.s32.totalorder %s15, 1
      %p54 = scmp.ne.s32.totalorder %s49, %s51
      %p55 = scmp.eq.s32.totalorder %s15, 0
      %p56 = por %p54, %p55
      %p57 = scmp.ne.s32.totalorder %s49, %s51
      %p58 = scmp.eq.s32.totalorder %s20, 1
      %p59 = por %p57, %p58
      %p60 = scmp.ne.s32.totalorder %s51, %s52
      %p61 = scmp.eq.s32.totalorder %s20, 0
      %p62 = por %p60, %p61
      %p63 = scmp.ne.s32.totalorder %s51, %s52
      %p64 = scmp.eq.s32.totalorder %s21, 1
      %p65 = por %p63, %p64
      %p67 = scmp.ne.s32.totalorder %s52, %s66
      %p68 = scmp.eq.s32.totalorder %s21, 0
      %p69 = por %p67, %p68
      %s70 = ssub.s32 %s15, %s22
      %p71 = scmp.eq.s32.totalorder %s70, 0
      %s73 = sadd.s32 %s72, 1
      %s74 = scalar_select %p71, %s72, %s73
      %p77 = pneg %p71
      %p78 = scmp.eq.s32.totalorder %s15, 1
      %p79 = por %p77, %p78
      %p80 = scmp.ne.s32.totalorder %s72, %s75
      %p81 = scmp.eq.s32.totalorder %s15, 0
      %p82 = por %p80, %p81
      %p83 = scmp.ne.s32.totalorder %s72, %s75
      %p84 = scmp.eq.s32.totalorder %s20, 1
      %p85 = por %p83, %p84
      %p86 = scmp.ne.s32.totalorder %s75, %s76
      %p87 = scmp.eq.s32.totalorder %s20, 0
      %p88 = por %p86, %p87
      %p89 = scmp.ne.s32.totalorder %s75, %s76
      %p90 = scmp.eq.s32.totalorder %s21, 1
      %p91 = por %p89, %p90
      %p93 = scmp.ne.s32.totalorder %s76, %s92
      %p94 = scmp.eq.s32.totalorder %s21, 0
      %p95 = por %p93, %p94
      %p96 = scmp.le.s32.totalorder 1, %s15
      %p97 = scmp.lt.s32.totalorder %s15, 3
      %p98 = pnand %p96, %p97
      %p99 = pneg %p98
      // Predicated region
      $region9: #{tpu_custom_call.1} parent=5 // pred_check
        _
      $region10: #{tpu_custom_call.1} parent=5 // pred_check_branch
        %101 = sbr.rel (%p98) target = $region12
      $region11: #{tpu_custom_call.1} parent=5 // pred_region
        %s102 = ssub.s32 %s15, 1
        // Predicated region
        $region13: #{tpu_custom_call.1} parent=11 // pred_check
          %p103 = pneg %p62
        $region14: #{tpu_custom_call.1} parent=11 // pred_check_branch
          %105 = sbr.rel (%p103) target = $region16
        $region15: #{tpu_custom_call.1} parent=11 // pred_region
          %107 = vsyncadd [#allocation8], 0
          %s108 = sshll.u32 %s1, 4
          %s109 = int_to_ptr.hbm [resolvable:$true] %s108
          %s110 = sshll.u32 [#allocation7], 4
          %s111 = int_to_ptr.vmem [resolvable:$true] %s110
          %116 = dma.hbm_to_vmem [thread:$0]  %s109, 4608, %s111, [#allocation8], 128, 128, 8
        $region16: #{tpu_custom_call.1} parent=11 // pred_fallthru
          _
      $region12: #{tpu_custom_call.1} parent=5 // pred_fallthru
        _
      %p117 = scmp.lt.s32.totalorder %s15, 2
      // Predicated region
      $region17: #{tpu_custom_call.1} parent=5 // pred_check
        %p118 = pneg %p117
      $region18: #{tpu_custom_call.1} parent=5 // pred_check_branch
        %120 = sbr.rel (%p118) target = $region20
      $region19: #{tpu_custom_call.1} parent=5 // pred_region
        // Predicated region
        $region21: #{tpu_custom_call.1} parent=19 // pred_check
          %p121 = pneg %p35
        $region22: #{tpu_custom_call.1} parent=19 // pred_check_branch
          %123 = sbr.rel (%p121) target = $region24
        $region23: #{tpu_custom_call.1} parent=19 // pred_region
          %s124 = sand.u32 %s25, 1
          %s125 = scalar_lea.sflag [#allocation5], %s124
          %s126 = sand.u32 %s25, 1
          %s127 = smul.addr %s126, 256
          %s128 = scalar_lea.vmem [#allocation4], %s127
          %130 = vsyncadd %s125, 0
          %s131 = smul.addr %s15, 32
          %s132 = smul.addr %s131, 8
          %s133 = scalar_lea.hbm %s0, %s132
          %s134 = sshll.u32 %s133, 4
          %s135 = int_to_ptr.hbm [resolvable:$true] %s134
          %s136 = sshll.u32 %s128, 4
          %s137 = int_to_ptr.vmem [resolvable:$true] %s136
          %142 = dma.hbm_to_vmem [thread:$0]  %s135, 4096, %s137, %s125, 128, 128, 8
        $region24: #{tpu_custom_call.1} parent=19 // pred_fallthru
          _
      $region20: #{tpu_custom_call.1} parent=5 // pred_fallthru
        _
      %p143 = scmp.le.s32.totalorder 1, %s15
      %p144 = scmp.lt.s32.totalorder %s15, 3
      %p145 = pnand %p143, %p144
      %p146 = pneg %p145
      // Predicated region
      $region25: #{tpu_custom_call.1} parent=5 // pred_check
        _
      $region26: #{tpu_custom_call.1} parent=5 // pred_check_branch
        %148 = sbr.rel (%p145) target = $region28
      $region27: #{tpu_custom_call.1} parent=5 // pred_region
        %s149 = ssub.s32 %s15, 1
        %s150 = sand.u32 %s28, 1
        %s151 = scalar_lea.sflag [#allocation5], %s150
        %s152 = sand.u32 %s28, 1
        %s153 = smul.addr %s152, 256
        %s154 = scalar_lea.vmem [#allocation4], %s153
        // Predicated region
        $region29: #{tpu_custom_call.1} parent=27 // pred_check
          %p155 = pneg %p41
        $region30: #{tpu_custom_call.1} parent=27 // pred_check_branch
          %157 = sbr.rel (%p155) target = $region32
        $region31: #{tpu_custom_call.1} parent=27 // pred_region
          %159 = dma.done %s151, 4096
        $region32: #{tpu_custom_call.1} parent=27 // pred_fallthru
          _
        // Predicated region
        $region33: #{tpu_custom_call.1} parent=27 // pred_check
          %p160 = pneg %p62
        $region34: #{tpu_custom_call.1} parent=27 // pred_check_branch
          %162 = sbr.rel (%p160) target = $region36
        $region35: #{tpu_custom_call.1} parent=27 // pred_region
          %164 = dma.done [#allocation8], 4608
        $region36: #{tpu_custom_call.1} parent=27 // pred_fallthru
          _
        %s165 = sand.u32 %s28, 1
        %s166 = scalar_lea.sflag [#allocation5], %s165
        %s167 = sand.u32 %s28, 1
        %s168 = smul.addr %s167, 256
        %s169 = scalar_lea.vmem [#allocation4], %s168
        %p170 = pneg %p41
        %p171 = pneg %p38
        %p172 = pneg %p62
        %p173 = pneg %p59
        %p174 = pneg %p88
        %p175 = pneg %p85
        %s176 = sand.u32 %s75, 1
        %s177 = scalar_lea.sflag [#allocation6], %s176
        %s178 = sand.u32 %s75, 1
        %s179 = smul.addr %s178, 64
        %s180 = scalar_lea.vmem [#allocation9], %s179
        %v181 = vld [vmem:[%s154] sm:$0xff]
        %v182 = vld [vmem:[%s154 + $0x8] sm:$0xff]
        %v183 = vld [vmem:[%s154 + $0x10] sm:$0xff]
        %v184 = vld [vmem:[%s154 + $0x18] sm:$0xff]
        %v185 = vld [vmem:[%s154 + $0x20] sm:$0xff]
        %v186 = vld [vmem:[%s154 + $0x28] sm:$0xff]
        %v187 = vld [vmem:[%s154 + $0x30] sm:$0xff]
        %v188 = vld [vmem:[%s154 + $0x38] sm:$0xff]
        %v189 = vld [vmem:[%s154 + $0x40] sm:$0xff]
        %v190 = vld [vmem:[%s154 + $0x48] sm:$0xff]
        %v191 = vld [vmem:[%s154 + $0x50] sm:$0xff]
        %v192 = vld [vmem:[%s154 + $0x58] sm:$0xff]
        %v193 = vld [vmem:[%s154 + $0x60] sm:$0xff]
        %v194 = vld [vmem:[%s154 + $0x68] sm:$0xff]
        %v195 = vld [vmem:[%s154 + $0x70] sm:$0xff]
        %v196 = vld [vmem:[%s154 + $0x78] sm:$0xff]
        %v197 = vld [vmem:[%s154 + $0x80] sm:$0xff]
        %v198 = vld [vmem:[%s154 + $0x88] sm:$0xff]
        %v199 = vld [vmem:[%s154 + $0x90] sm:$0xff]
        %v200 = vld [vmem:[%s154 + $0x98] sm:$0xff]
        %v201 = vld [vmem:[%s154 + $0xa0] sm:$0xff]
        %v202 = vld [vmem:[%s154 + $0xa8] sm:$0xff]
        %v203 = vld [vmem:[%s154 + $0xb0] sm:$0xff]
        %v204 = vld [vmem:[%s154 + $0xb8] sm:$0xff]
        %v205 = vld [vmem:[%s154 + $0xc0] sm:$0xff]
        %v206 = vld [vmem:[%s154 + $0xc8] sm:$0xff]
        %v207 = vld [vmem:[%s154 + $0xd0] sm:$0xff]
        %v208 = vld [vmem:[%s154 + $0xd8] sm:$0xff]
        %v209 = vld [vmem:[%s154 + $0xe0] sm:$0xff]
        %v210 = vld [vmem:[%s154 + $0xe8] sm:$0xff]
        %v211 = vld [vmem:[%s154 + $0xf0] sm:$0xff]
        %v212 = vld [vmem:[%s154 + $0xf8] sm:$0xff]
        %vm213 = vcmask 261120
        %214 = vst.msk [vmem:[#allocation2] sm:$0xff] %vm213, 0.0
        %215 = vst.msk [vmem:[#allocation2 + $0x8] sm:$0xff] %vm213, 0.0
        %vm216 = vcmask 254976
        %217 = vst.msk [vmem:[#allocation2 + $0x10] sm:$0x3] %vm216, 0.0
        %218 = vst.msk [vmem:[#allocation2 + $0x18] sm:$0xff] %vm213, 0.0
        %219 = vst.msk [vmem:[#allocation2 + $0x20] sm:$0xff] %vm213, 0.0
        %220 = vst.msk [vmem:[#allocation2 + $0x28] sm:$0x3] %vm216, 0.0
        %221 = vst.msk [vmem:[#allocation2 + $0x30] sm:$0xff] %vm213, 0.0
        %222 = vst.msk [vmem:[#allocation2 + $0x38] sm:$0xff] %vm213, 0.0
        %223 = vst.msk [vmem:[#allocation2 + $0x40] sm:$0x3] %vm216, 0.0
        %224 = vst.msk [vmem:[#allocation2 + $0x48] sm:$0xff] %vm213, 0.0
        %225 = vst.msk [vmem:[#allocation2 + $0x50] sm:$0xff] %vm213, 0.0
        %226 = vst.msk [vmem:[#allocation2 + $0x58] sm:$0x3] %vm216, 0.0
        %227 = vst.msk [vmem:[#allocation2 + $0x60] sm:$0xff] %vm213, 0.0
        %228 = vst.msk [vmem:[#allocation2 + $0x68] sm:$0xff] %vm213, 0.0
        %229 = vst.msk [vmem:[#allocation2 + $0x70] sm:$0x3] %vm216, 0.0
        %230 = vst.msk [vmem:[#allocation2 + $0x78] sm:$0xff] %vm213, 0.0
        %231 = vst.msk [vmem:[#allocation2 + $0x80] sm:$0xff] %vm213, 0.0
        %232 = vst.msk [vmem:[#allocation2 + $0x88] sm:$0x3] %vm216, 0.0
        %233 = vst.msk [vmem:[#allocation2 + $0x90] sm:$0xff] %vm213, 0.0
        %234 = vst.msk [vmem:[#allocation2 + $0x98] sm:$0xff] %vm213, 0.0
        %235 = vst.msk [vmem:[#allocation2 + $0xa0] sm:$0x3] %vm216, 0.0
        %236 = vst.msk [vmem:[#allocation2 + $0xa8] sm:$0xff] %vm213, 0.0
        %237 = vst.msk [vmem:[#allocation2 + $0xb0] sm:$0xff] %vm213, 0.0
        %238 = vst.msk [vmem:[#allocation2 + $0xb8] sm:$0x3] %vm216, 0.0
        %239 = vst.msk [vmem:[#allocation2 + $0xc0] sm:$0xff] %vm213, 0.0
        %240 = vst.msk [vmem:[#allocation2 + $0xc8] sm:$0xff] %vm213, 0.0
        %241 = vst.msk [vmem:[#allocation2 + $0xd0] sm:$0x3] %vm216, 0.0
        %242 = vst.msk [vmem:[#allocation2 + $0xd8] sm:$0xff] %vm213, 0.0
        %243 = vst.msk [vmem:[#allocation2 + $0xe0] sm:$0xff] %vm213, 0.0
        %244 = vst.msk [vmem:[#allocation2 + $0xe8] sm:$0x3] %vm216, 0.0
        %245 = vst.msk [vmem:[#allocation2 + $0xf0] sm:$0xff] %vm213, 0.0
        %246 = vst.msk [vmem:[#allocation2 + $0xf8] sm:$0xff] %vm213, 0.0
        %247 = vst.msk [vmem:[#allocation2 + $0x100] sm:$0x3] %vm216, 0.0
        %248 = vst.msk [vmem:[#allocation2 + $0x108] sm:$0xff] %vm213, 0.0
        %249 = vst.msk [vmem:[#allocation2 + $0x110] sm:$0xff] %vm213, 0.0
        %250 = vst.msk [vmem:[#allocation2 + $0x118] sm:$0x3] %vm216, 0.0
        %251 = vst.msk [vmem:[#allocation2 + $0x120] sm:$0xff] %vm213, 0.0
        %252 = vst.msk [vmem:[#allocation2 + $0x128] sm:$0xff] %vm213, 0.0
        %253 = vst.msk [vmem:[#allocation2 + $0x130] sm:$0x3] %vm216, 0.0
        %254 = vst.msk [vmem:[#allocation2 + $0x138] sm:$0xff] %vm213, 0.0
        %255 = vst.msk [vmem:[#allocation2 + $0x140] sm:$0xff] %vm213, 0.0
        %256 = vst.msk [vmem:[#allocation2 + $0x148] sm:$0x3] %vm216, 0.0
        %257 = vst.msk [vmem:[#allocation2 + $0x150] sm:$0xff] %vm213, 0.0
        %258 = vst.msk [vmem:[#allocation2 + $0x158] sm:$0xff] %vm213, 0.0
        %259 = vst.msk [vmem:[#allocation2 + $0x160] sm:$0x3] %vm216, 0.0
        %260 = vst.msk [vmem:[#allocation2 + $0x168] sm:$0xff] %vm213, 0.0
        %261 = vst.msk [vmem:[#allocation2 + $0x170] sm:$0xff] %vm213, 0.0
        %262 = vst.msk [vmem:[#allocation2 + $0x178] sm:$0x3] %vm216, 0.0
        %263 = vst.msk [vmem:[#allocation2 + $0x180] sm:$0xff] %vm213, 0.0
        %264 = vst.msk [vmem:[#allocation2 + $0x188] sm:$0xff] %vm213, 0.0
        %265 = vst.msk [vmem:[#allocation2 + $0x190] sm:$0x3] %vm216, 0.0
        %266 = vst.msk [vmem:[#allocation2 + $0x198] sm:$0xff] %vm213, 0.0
        %267 = vst.msk [vmem:[#allocation2 + $0x1a0] sm:$0xff] %vm213, 0.0
        %268 = vst.msk [vmem:[#allocation2 + $0x1a8] sm:$0x3] %vm216, 0.0
        %s269 = scalar_lea.vmem [#allocation2], 24
        %270 = vst.msk [vmem:[%s269 + $0x1] sm:$0xff] %vm213, %v181
        %271 = vst.msk [vmem:[%s269 + $0x9] sm:$0xff] %vm213, %v182
        %272 = vst.msk [vmem:[%s269 + $0x19] sm:$0xff] %vm213, %v183
        %273 = vst.msk [vmem:[%s269 + $0x21] sm:$0xff] %vm213, %v184
        %274 = vst.msk [vmem:[%s269 + $0x31] sm:$0xff] %vm213, %v185
        %275 = vst.msk [vmem:[%s269 + $0x39] sm:$0xff] %vm213, %v186
        %276 = vst.msk [vmem:[%s269 + $0x49] sm:$0xff] %vm213, %v187
        %277 = vst.msk [vmem:[%s269 + $0x51] sm:$0xff] %vm213, %v188
        %278 = vst.msk [vmem:[%s269 + $0x61] sm:$0xff] %vm213, %v189
        %279 = vst.msk [vmem:[%s269 + $0x69] sm:$0xff] %vm213, %v190
        %280 = vst.msk [vmem:[%s269 + $0x79] sm:$0xff] %vm213, %v191
        %281 = vst.msk [vmem:[%s269 + $0x81] sm:$0xff] %vm213, %v192
        %282 = vst.msk [vmem:[%s269 + $0x91] sm:$0xff] %vm213, %v193
        %283 = vst.msk [vmem:[%s269 + $0x99] sm:$0xff] %vm213, %v194
        %284 = vst.msk [vmem:[%s269 + $0xa9] sm:$0xff] %vm213, %v195
        %285 = vst.msk [vmem:[%s269 + $0xb1] sm:$0xff] %vm213, %v196
        %286 = vst.msk [vmem:[%s269 + $0xc1] sm:$0xff] %vm213, %v197
        %287 = vst.msk [vmem:[%s269 + $0xc9] sm:$0xff] %vm213, %v198
        %288 = vst.msk [vmem:[%s269 + $0xd9] sm:$0xff] %vm213, %v199
        %289 = vst.msk [vmem:[%s269 + $0xe1] sm:$0xff] %vm213, %v200
        %290 = vst.msk [vmem:[%s269 + $0xf1] sm:$0xff] %vm213, %v201
        %291 = vst.msk [vmem:[%s269 + $0xf9] sm:$0xff] %vm213, %v202
        %292 = vst.msk [vmem:[%s269 + $0x109] sm:$0xff] %vm213, %v203
        %293 = vst.msk [vmem:[%s269 + $0x111] sm:$0xff] %vm213, %v204
        %294 = vst.msk [vmem:[%s269 + $0x121] sm:$0xff] %vm213, %v205
        %295 = vst.msk [vmem:[%s269 + $0x129] sm:$0xff] %vm213, %v206
        %296 = vst.msk [vmem:[%s269 + $0x139] sm:$0xff] %vm213, %v207
        %297 = vst.msk [vmem:[%s269 + $0x141] sm:$0xff] %vm213, %v208
        %298 = vst.msk [vmem:[%s269 + $0x151] sm:$0xff] %vm213, %v209
        %299 = vst.msk [vmem:[%s269 + $0x159] sm:$0xff] %vm213, %v210
        %300 = vst.msk [vmem:[%s269 + $0x169] sm:$0xff] %vm213, %v211
        %301 = vst.msk [vmem:[%s269 + $0x171] sm:$0xff] %vm213, %v212
        %v302 = vld [vmem:[#allocation2] sm:$0xff]
        %v303 = vld [vmem:[#allocation2 + $0x8] sm:$0xff]
        %v304 = vld [vmem:[#allocation2 + $0x18] sm:$0xff]
        %v305 = vld [vmem:[#allocation2 + $0x20] sm:$0xff]
        %v306 = vld [vmem:[#allocation2 + $0x30] sm:$0xff]
        %v307 = vld [vmem:[#allocation2 + $0x38] sm:$0xff]
        %v308 = vld [vmem:[#allocation2 + $0x48] sm:$0xff]
        %v309 = vld [vmem:[#allocation2 + $0x50] sm:$0xff]
        %v310 = vld [vmem:[#allocation2 + $0x60] sm:$0xff]
        %v311 = vld [vmem:[#allocation2 + $0x68] sm:$0xff]
        %v312 = vld [vmem:[#allocation2 + $0x78] sm:$0xff]
        %v313 = vld [vmem:[#allocation2 + $0x80] sm:$0xff]
        %v314 = vld [vmem:[#allocation2 + $0x90] sm:$0xff]
        %v315 = vld [vmem:[#allocation2 + $0x98] sm:$0xff]
        %v316 = vld [vmem:[#allocation2 + $0xa8] sm:$0xff]
        %v317 = vld [vmem:[#allocation2 + $0xb0] sm:$0xff]
        %v318 = vld [vmem:[#allocation2 + $0xc0] sm:$0xff]
        %v319 = vld [vmem:[#allocation2 + $0xc8] sm:$0xff]
        %v320 = vld [vmem:[#allocation2 + $0xd8] sm:$0xff]
        %v321 = vld [vmem:[#allocation2 + $0xe0] sm:$0xff]
        %v322 = vld [vmem:[#allocation2 + $0xf0] sm:$0xff]
        %v323 = vld [vmem:[#allocation2 + $0xf8] sm:$0xff]
        %v324 = vld [vmem:[#allocation2 + $0x108] sm:$0xff]
        %v325 = vld [vmem:[#allocation2 + $0x110] sm:$0xff]
        %v326 = vld [vmem:[#allocation2 + $0x120] sm:$0xff]
        %v327 = vld [vmem:[#allocation2 + $0x128] sm:$0xff]
        %v328 = vld [vmem:[#allocation2 + $0x138] sm:$0xff]
        %v329 = vld [vmem:[#allocation2 + $0x140] sm:$0xff]
        %v330 = vld [vmem:[#allocation2 + $0x150] sm:$0xff]
        %v331 = vld [vmem:[#allocation2 + $0x158] sm:$0xff]
        %v332 = vld [vmem:[#allocation2 + $0x168] sm:$0xff]
        %v333 = vld [vmem:[#allocation2 + $0x170] sm:$0xff]
        %v334 = vld [vmem:[#allocation2 + $0x180] sm:$0xff]
        %v335 = vld [vmem:[#allocation2 + $0x188] sm:$0xff]
        %v336 = vld [vmem:[#allocation2 + $0x198] sm:$0xff]
        %v337 = vld [vmem:[#allocation2 + $0x1a0] sm:$0xff]
        %v338 = vmul.f32 %v302, 0.25
        %v339 = vmul.f32 %v303, 0.25
        %v340 = vmul.f32 %v304, 0.25
        %v341 = vmul.f32 %v305, 0.25
        %v342 = vmul.f32 %v306, 0.25
        %v343 = vmul.f32 %v307, 0.25
        %v344 = vmul.f32 %v308, 0.25
        %v345 = vmul.f32 %v309, 0.25
        %v346 = vmul.f32 %v310, 0.25
        %v347 = vmul.f32 %v311, 0.25
        %v348 = vmul.f32 %v312, 0.25
        %v349 = vmul.f32 %v313, 0.25
        %v350 = vmul.f32 %v314, 0.25
        %v351 = vmul.f32 %v315, 0.25
        %v352 = vmul.f32 %v316, 0.25
        %v353 = vmul.f32 %v317, 0.25
        %v354 = vmul.f32 %v318, 0.25
        %v355 = vmul.f32 %v319, 0.25
        %v356 = vmul.f32 %v320, 0.25
        %v357 = vmul.f32 %v321, 0.25
        %v358 = vmul.f32 %v322, 0.25
        %v359 = vmul.f32 %v323, 0.25
        %v360 = vmul.f32 %v324, 0.25
        %v361 = vmul.f32 %v325, 0.25
        %v362 = vmul.f32 %v326, 0.25
        %v363 = vmul.f32 %v327, 0.25
        %v364 = vmul.f32 %v328, 0.25
        %v365 = vmul.f32 %v329, 0.25
        %v366 = vmul.f32 %v330, 0.25
        %v367 = vmul.f32 %v331, 0.25
        %v368 = vmul.f32 %v332, 0.25
        %v369 = vmul.f32 %v333, 0.25
        %v370 = vmul.f32 %v334, 0.25
        %v371 = vmul.f32 %v335, 0.25
        %v372 = vmul.f32 %v336, 0.25
        %v373 = vmul.f32 %v337, 0.25
        %v374 = vadd.f32 %v338, 0.0
        %v375 = vadd.f32 %v339, 0.0
        %v376 = vadd.f32 %v340, 0.0
        %v377 = vadd.f32 %v341, 0.0
        %v378 = vadd.f32 %v342, 0.0
        %v379 = vadd.f32 %v343, 0.0
        %v380 = vadd.f32 %v344, 0.0
        %v381 = vadd.f32 %v345, 0.0
        %v382 = vadd.f32 %v346, 0.0
        %v383 = vadd.f32 %v347, 0.0
        %v384 = vadd.f32 %v348, 0.0
        %v385 = vadd.f32 %v349, 0.0
        %v386 = vadd.f32 %v350, 0.0
        %v387 = vadd.f32 %v351, 0.0
        %v388 = vadd.f32 %v352, 0.0
        %v389 = vadd.f32 %v353, 0.0
        %v390 = vadd.f32 %v354, 0.0
        %v391 = vadd.f32 %v355, 0.0
        %v392 = vadd.f32 %v356, 0.0
        %v393 = vadd.f32 %v357, 0.0
        %v394 = vadd.f32 %v358, 0.0
        %v395 = vadd.f32 %v359, 0.0
        %v396 = vadd.f32 %v360, 0.0
        %v397 = vadd.f32 %v361, 0.0
        %v398 = vadd.f32 %v362, 0.0
        %v399 = vadd.f32 %v363, 0.0
        %v400 = vadd.f32 %v364, 0.0
        %v401 = vadd.f32 %v365, 0.0
        %v402 = vadd.f32 %v366, 0.0
        %v403 = vadd.f32 %v367, 0.0
        %v404 = vadd.f32 %v368, 0.0
        %v405 = vadd.f32 %v369, 0.0
        %v406 = vadd.f32 %v370, 0.0
        %v407 = vadd.f32 %v371, 0.0
        %v408 = vadd.f32 %v372, 0.0
        %v409 = vadd.f32 %v373, 0.0
        %v410 = vld [vmem:[#allocation2 + $0x1] sm:$0xff]
        %v411 = vld [vmem:[#allocation2 + $0x9] sm:$0xff]
        %v412 = vld [vmem:[#allocation2 + $0x19] sm:$0xff]
        %v413 = vld [vmem:[#allocation2 + $0x21] sm:$0xff]
        %v414 = vld [vmem:[#allocation2 + $0x31] sm:$0xff]
        %v415 = vld [vmem:[#allocation2 + $0x39] sm:$0xff]
        %v416 = vld [vmem:[#allocation2 + $0x49] sm:$0xff]
        %v417 = vld [vmem:[#allocation2 + $0x51] sm:$0xff]
        %v418 = vld [vmem:[#allocation2 + $0x61] sm:$0xff]
        %v419 = vld [vmem:[#allocation2 + $0x69] sm:$0xff]
        %v420 = vld [vmem:[#allocation2 + $0x79] sm:$0xff]
        %v421 = vld [vmem:[#allocation2 + $0x81] sm:$0xff]
        %v422 = vld [vmem:[#allocation2 + $0x91] sm:$0xff]
        %v423 = vld [vmem:[#allocation2 + $0x99] sm:$0xff]
        %v424 = vld [vmem:[#allocation2 + $0xa9] sm:$0xff]
        %v425 = vld [vmem:[#allocation2 + $0xb1] sm:$0xff]
        %v426 = vld [vmem:[#allocation2 + $0xc1] sm:$0xff]
        %v427 = vld [vmem:[#allocation2 + $0xc9] sm:$0xff]
        %v428 = vld [vmem:[#allocation2 + $0xd9] sm:$0xff]
        %v429 = vld [vmem:[#allocation2 + $0xe1] sm:$0xff]
        %v430 = vld [vmem:[#allocation2 + $0xf1] sm:$0xff]
        %v431 = vld [vmem:[#allocation2 + $0xf9] sm:$0xff]
        %v432 = vld [vmem:[#allocation2 + $0x109] sm:$0xff]
        %v433 = vld [vmem:[#allocation2 + $0x111] sm:$0xff]
        %v434 = vld [vmem:[#allocation2 + $0x121] sm:$0xff]
        %v435 = vld [vmem:[#allocation2 + $0x129] sm:$0xff]
        %v436 = vld [vmem:[#allocation2 + $0x139] sm:$0xff]
        %v437 = vld [vmem:[#allocation2 + $0x141] sm:$0xff]
        %v438 = vld [vmem:[#allocation2 + $0x151] sm:$0xff]
        %v439 = vld [vmem:[#allocation2 + $0x159] sm:$0xff]
        %v440 = vld [vmem:[#allocation2 + $0x169] sm:$0xff]
        %v441 = vld [vmem:[#allocation2 + $0x171] sm:$0xff]
        %v442 = vld [vmem:[#allocation2 + $0x181] sm:$0xff]
        %v443 = vld [vmem:[#allocation2 + $0x189] sm:$0xff]
        %v444 = vld [vmem:[#allocation2 + $0x199] sm:$0xff]
        %v445 = vld [vmem:[#allocation2 + $0x1a1] sm:$0xff]
        %v446 = vmul.f32 %v410, 0.5
        %v447 = vmul.f32 %v411, 0.5
        %v448 = vmul.f32 %v412, 0.5
        %v449 = vmul.f32 %v413, 0.5
        %v450 = vmul.f32 %v414, 0.5
        %v451 = vmul.f32 %v415, 0.5
        %v452 = vmul.f32 %v416, 0.5
        %v453 = vmul.f32 %v417, 0.5
        %v454 = vmul.f32 %v418, 0.5
        %v455 = vmul.f32 %v419, 0.5
        %v456 = vmul.f32 %v420, 0.5
        %v457 = vmul.f32 %v421, 0.5
        %v458 = vmul.f32 %v422, 0.5
        %v459 = vmul.f32 %v423, 0.5
        %v460 = vmul.f32 %v424, 0.5
        %v461 = vmul.f32 %v425, 0.5
        %v462 = vmul.f32 %v426, 0.5
        %v463 = vmul.f32 %v427, 0.5
        %v464 = vmul.f32 %v428, 0.5
        %v465 = vmul.f32 %v429, 0.5
        %v466 = vmul.f32 %v430, 0.5
        %v467 = vmul.f32 %v431, 0.5
        %v468 = vmul.f32 %v432, 0.5
        %v469 = vmul.f32 %v433, 0.5
        %v470 = vmul.f32 %v434, 0.5
        %v471 = vmul.f32 %v435, 0.5
        %v472 = vmul.f32 %v436, 0.5
        %v473 = vmul.f32 %v437, 0.5
        %v474 = vmul.f32 %v438, 0.5
        %v475 = vmul.f32 %v439, 0.5
        %v476 = vmul.f32 %v440, 0.5
        %v477 = vmul.f32 %v441, 0.5
        %v478 = vmul.f32 %v442, 0.5
        %v479 = vmul.f32 %v443, 0.5
        %v480 = vmul.f32 %v444, 0.5
        %v481 = vmul.f32 %v445, 0.5
        %v482 = vadd.f32 %v374, %v446
        %v483 = vadd.f32 %v375, %v447
        %v484 = vadd.f32 %v376, %v448
        %v485 = vadd.f32 %v377, %v449
        %v486 = vadd.f32 %v378, %v450
        %v487 = vadd.f32 %v379, %v451
        %v488 = vadd.f32 %v380, %v452
        %v489 = vadd.f32 %v381, %v453
        %v490 = vadd.f32 %v382, %v454
        %v491 = vadd.f32 %v383, %v455
        %v492 = vadd.f32 %v384, %v456
        %v493 = vadd.f32 %v385, %v457
        %v494 = vadd.f32 %v386, %v458
        %v495 = vadd.f32 %v387, %v459
        %v496 = vadd.f32 %v388, %v460
        %v497 = vadd.f32 %v389, %v461
        %v498 = vadd.f32 %v390, %v462
        %v499 = vadd.f32 %v391, %v463
        %v500 = vadd.f32 %v392, %v464
        %v501 = vadd.f32 %v393, %v465
        %v502 = vadd.f32 %v394, %v466
        %v503 = vadd.f32 %v395, %v467
        %v504 = vadd.f32 %v396, %v468
        %v505 = vadd.f32 %v397, %v469
        %v506 = vadd.f32 %v398, %v470
        %v507 = vadd.f32 %v399, %v471
        %v508 = vadd.f32 %v400, %v472
        %v509 = vadd.f32 %v401, %v473
        %v510 = vadd.f32 %v402, %v474
        %v511 = vadd.f32 %v403, %v475
        %v512 = vadd.f32 %v404, %v476
        %v513 = vadd.f32 %v405, %v477
        %v514 = vadd.f32 %v406, %v478
        %v515 = vadd.f32 %v407, %v479
        %v516 = vadd.f32 %v408, %v480
        %v517 = vadd.f32 %v409, %v481
        %v518 = vld [vmem:[#allocation2 + $0x2] sm:$0xff]
        %v519 = vld [vmem:[#allocation2 + $0xa] sm:$0xff]
        %v520 = vld [vmem:[#allocation2 + $0x1a] sm:$0xff]
        %v521 = vld [vmem:[#allocation2 + $0x22] sm:$0xff]
        %v522 = vld [vmem:[#allocation2 + $0x32] sm:$0xff]
        %v523 = vld [vmem:[#allocation2 + $0x3a] sm:$0xff]
        %v524 = vld [vmem:[#allocation2 + $0x4a] sm:$0xff]
        %v525 = vld [vmem:[#allocation2 + $0x52] sm:$0xff]
        %v526 = vld [vmem:[#allocation2 + $0x62] sm:$0xff]
        %v527 = vld [vmem:[#allocation2 + $0x6a] sm:$0xff]
        %v528 = vld [vmem:[#allocation2 + $0x7a] sm:$0xff]
        %v529 = vld [vmem:[#allocation2 + $0x82] sm:$0xff]
        %v530 = vld [vmem:[#allocation2 + $0x92] sm:$0xff]
        %v531 = vld [vmem:[#allocation2 + $0x9a] sm:$0xff]
        %v532 = vld [vmem:[#allocation2 + $0xaa] sm:$0xff]
        %v533 = vld [vmem:[#allocation2 + $0xb2] sm:$0xff]
        %v534 = vld [vmem:[#allocation2 + $0xc2] sm:$0xff]
        %v535 = vld [vmem:[#allocation2 + $0xca] sm:$0xff]
        %v536 = vld [vmem:[#allocation2 + $0xda] sm:$0xff]
        %v537 = vld [vmem:[#allocation2 + $0xe2] sm:$0xff]
        %v538 = vld [vmem:[#allocation2 + $0xf2] sm:$0xff]
        %v539 = vld [vmem:[#allocation2 + $0xfa] sm:$0xff]
        %v540 = vld [vmem:[#allocation2 + $0x10a] sm:$0xff]
        %v541 = vld [vmem:[#allocation2 + $0x112] sm:$0xff]
        %v542 = vld [vmem:[#allocation2 + $0x122] sm:$0xff]
        %v543 = vld [vmem:[#allocation2 + $0x12a] sm:$0xff]
        %v544 = vld [vmem:[#allocation2 + $0x13a] sm:$0xff]
        %v545 = vld [vmem:[#allocation2 + $0x142] sm:$0xff]
        %v546 = vld [vmem:[#allocation2 + $0x152] sm:$0xff]
        %v547 = vld [vmem:[#allocation2 + $0x15a] sm:$0xff]
        %v548 = vld [vmem:[#allocation2 + $0x16a] sm:$0xff]
        %v549 = vld [vmem:[#allocation2 + $0x172] sm:$0xff]
        %v550 = vld [vmem:[#allocation2 + $0x182] sm:$0xff]
        %v551 = vld [vmem:[#allocation2 + $0x18a] sm:$0xff]
        %v552 = vld [vmem:[#allocation2 + $0x19a] sm:$0xff]
        %v553 = vld [vmem:[#allocation2 + $0x1a2] sm:$0xff]
        %v554 = vmul.f32 %v518, 0.25
        %v555 = vmul.f32 %v519, 0.25
        %v556 = vmul.f32 %v520, 0.25
        %v557 = vmul.f32 %v521, 0.25
        %v558 = vmul.f32 %v522, 0.25
        %v559 = vmul.f32 %v523, 0.25
        %v560 = vmul.f32 %v524, 0.25
        %v561 = vmul.f32 %v525, 0.25
        %v562 = vmul.f32 %v526, 0.25
        %v563 = vmul.f32 %v527, 0.25
        %v564 = vmul.f32 %v528, 0.25
        %v565 = vmul.f32 %v529, 0.25
        %v566 = vmul.f32 %v530, 0.25
        %v567 = vmul.f32 %v531, 0.25
        %v568 = vmul.f32 %v532, 0.25
        %v569 = vmul.f32 %v533, 0.25
        %v570 = vmul.f32 %v534, 0.25
        %v571 = vmul.f32 %v535, 0.25
        %v572 = vmul.f32 %v536, 0.25
        %v573 = vmul.f32 %v537, 0.25
        %v574 = vmul.f32 %v538, 0.25
        %v575 = vmul.f32 %v539, 0.25
        %v576 = vmul.f32 %v540, 0.25
        %v577 = vmul.f32 %v541, 0.25
        %v578 = vmul.f32 %v542, 0.25
        %v579 = vmul.f32 %v543, 0.25
        %v580 = vmul.f32 %v544, 0.25
        %v581 = vmul.f32 %v545, 0.25
        %v582 = vmul.f32 %v546, 0.25
        %v583 = vmul.f32 %v547, 0.25
        %v584 = vmul.f32 %v548, 0.25
        %v585 = vmul.f32 %v549, 0.25
        %v586 = vmul.f32 %v550, 0.25
        %v587 = vmul.f32 %v551, 0.25
        %v588 = vmul.f32 %v552, 0.25
        %v589 = vmul.f32 %v553, 0.25
        %v590 = vadd.f32 %v482, %v554
        %v591 = vadd.f32 %v483, %v555
        %v592 = vadd.f32 %v484, %v556
        %v593 = vadd.f32 %v485, %v557
        %v594 = vadd.f32 %v486, %v558
        %v595 = vadd.f32 %v487, %v559
        %v596 = vadd.f32 %v488, %v560
        %v597 = vadd.f32 %v489, %v561
        %v598 = vadd.f32 %v490, %v562
        %v599 = vadd.f32 %v491, %v563
        %v600 = vadd.f32 %v492, %v564
        %v601 = vadd.f32 %v493, %v565
        %v602 = vadd.f32 %v494, %v566
        %v603 = vadd.f32 %v495, %v567
        %v604 = vadd.f32 %v496, %v568
        %v605 = vadd.f32 %v497, %v569
        %v606 = vadd.f32 %v498, %v570
        %v607 = vadd.f32 %v499, %v571
        %v608 = vadd.f32 %v500, %v572
        %v609 = vadd.f32 %v501, %v573
        %v610 = vadd.f32 %v502, %v574
        %v611 = vadd.f32 %v503, %v575
        %v612 = vadd.f32 %v504, %v576
        %v613 = vadd.f32 %v505, %v577
        %v614 = vadd.f32 %v506, %v578
        %v615 = vadd.f32 %v507, %v579
        %v616 = vadd.f32 %v508, %v580
        %v617 = vadd.f32 %v509, %v581
        %v618 = vadd.f32 %v510, %v582
        %v619 = vadd.f32 %v511, %v583
        %v620 = vadd.f32 %v512, %v584
        %v621 = vadd.f32 %v513, %v585
        %v622 = vadd.f32 %v514, %v586
        %v623 = vadd.f32 %v515, %v587
        %v624 = vadd.f32 %v516, %v588
        %v625 = vadd.f32 %v517, %v589
        %v626 = vmul.f32 %v590, 0.25
        %v627 = vmul.f32 %v591, 0.25
        %v628 = vmul.f32 %v592, 0.25
        %v629 = vmul.f32 %v593, 0.25
        %v630 = vmul.f32 %v594, 0.25
        %v631 = vmul.f32 %v595, 0.25
        %v632 = vmul.f32 %v596, 0.25
        %v633 = vmul.f32 %v597, 0.25
        %v634 = vmul.f32 %v598, 0.25
        %v635 = vmul.f32 %v599, 0.25
        %v636 = vmul.f32 %v600, 0.25
        %v637 = vmul.f32 %v601, 0.25
        %v638 = vmul.f32 %v602, 0.25
        %v639 = vmul.f32 %v603, 0.25
        %v640 = vmul.f32 %v604, 0.25
        %v641 = vmul.f32 %v605, 0.25
        %v642 = vmul.f32 %v606, 0.25
        %v643 = vmul.f32 %v607, 0.25
        %v644 = vmul.f32 %v608, 0.25
        %v645 = vmul.f32 %v609, 0.25
        %v646 = vmul.f32 %v610, 0.25
        %v647 = vmul.f32 %v611, 0.25
        %v648 = vmul.f32 %v612, 0.25
        %v649 = vmul.f32 %v613, 0.25
        %v650 = vmul.f32 %v614, 0.25
        %v651 = vmul.f32 %v615, 0.25
        %v652 = vmul.f32 %v616, 0.25
        %v653 = vmul.f32 %v617, 0.25
        %v654 = vmul.f32 %v618, 0.25
        %v655 = vmul.f32 %v619, 0.25
        %v656 = vmul.f32 %v620, 0.25
        %v657 = vmul.f32 %v621, 0.25
        %v658 = vadd.f32 %v626, 0.0
        %v659 = vadd.f32 %v627, 0.0
        %v660 = vadd.f32 %v628, 0.0
        %v661 = vadd.f32 %v629, 0.0
        %v662 = vadd.f32 %v630, 0.0
        %v663 = vadd.f32 %v631, 0.0
        %v664 = vadd.f32 %v632, 0.0
        %v665 = vadd.f32 %v633, 0.0
        %v666 = vadd.f32 %v634, 0.0
        %v667 = vadd.f32 %v635, 0.0
        %v668 = vadd.f32 %v636, 0.0
        %v669 = vadd.f32 %v637, 0.0
        %v670 = vadd.f32 %v638, 0.0
        %v671 = vadd.f32 %v639, 0.0
        %v672 = vadd.f32 %v640, 0.0
        %v673 = vadd.f32 %v641, 0.0
        %v674 = vadd.f32 %v642, 0.0
        %v675 = vadd.f32 %v643, 0.0
        %v676 = vadd.f32 %v644, 0.0
        %v677 = vadd.f32 %v645, 0.0
        %v678 = vadd.f32 %v646, 0.0
        %v679 = vadd.f32 %v647, 0.0
        %v680 = vadd.f32 %v648, 0.0
        %v681 = vadd.f32 %v649, 0.0
        %v682 = vadd.f32 %v650, 0.0
        %v683 = vadd.f32 %v651, 0.0
        %v684 = vadd.f32 %v652, 0.0
        %v685 = vadd.f32 %v653, 0.0
        %v686 = vadd.f32 %v654, 0.0
        %v687 = vadd.f32 %v655, 0.0
        %v688 = vadd.f32 %v656, 0.0
        %v689 = vadd.f32 %v657, 0.0
        %v690 = vmul.f32 %v592, 0.5
        %v691 = vmul.f32 %v593, 0.5
        %v692 = vmul.f32 %v594, 0.5
        %v693 = vmul.f32 %v595, 0.5
        %v694 = vmul.f32 %v596, 0.5
        %v695 = vmul.f32 %v597, 0.5
        %v696 = vmul.f32 %v598, 0.5
        %v697 = vmul.f32 %v599, 0.5
        %v698 = vmul.f32 %v600, 0.5
        %v699 = vmul.f32 %v601, 0.5
        %v700 = vmul.f32 %v602, 0.5
        %v701 = vmul.f32 %v603, 0.5
        %v702 = vmul.f32 %v604, 0.5
        %v703 = vmul.f32 %v605, 0.5
        %v704 = vmul.f32 %v606, 0.5
        %v705 = vmul.f32 %v607, 0.5
        %v706 = vmul.f32 %v608, 0.5
        %v707 = vmul.f32 %v609, 0.5
        %v708 = vmul.f32 %v610, 0.5
        %v709 = vmul.f32 %v611, 0.5
        %v710 = vmul.f32 %v612, 0.5
        %v711 = vmul.f32 %v613, 0.5
        %v712 = vmul.f32 %v614, 0.5
        %v713 = vmul.f32 %v615, 0.5
        %v714 = vmul.f32 %v616, 0.5
        %v715 = vmul.f32 %v617, 0.5
        %v716 = vmul.f32 %v618, 0.5
        %v717 = vmul.f32 %v619, 0.5
        %v718 = vmul.f32 %v620, 0.5
        %v719 = vmul.f32 %v621, 0.5
        %v720 = vmul.f32 %v622, 0.5
        %v721 = vmul.f32 %v623, 0.5
        %v722 = vadd.f32 %v658, %v690
        %v723 = vadd.f32 %v659, %v691
        %v724 = vadd.f32 %v660, %v692
        %v725 = vadd.f32 %v661, %v693
        %v726 = vadd.f32 %v662, %v694
        %v727 = vadd.f32 %v663, %v695
        %v728 = vadd.f32 %v664, %v696
        %v729 = vadd.f32 %v665, %v697
        %v730 = vadd.f32 %v666, %v698
        %v731 = vadd.f32 %v667, %v699
        %v732 = vadd.f32 %v668, %v700
        %v733 = vadd.f32 %v669, %v701
        %v734 = vadd.f32 %v670, %v702
        %v735 = vadd.f32 %v671, %v703
        %v736 = vadd.f32 %v672, %v704
        %v737 = vadd.f32 %v673, %v705
        %v738 = vadd.f32 %v674, %v706
        %v739 = vadd.f32 %v675, %v707
        %v740 = vadd.f32 %v676, %v708
        %v741 = vadd.f32 %v677, %v709
        %v742 = vadd.f32 %v678, %v710
        %v743 = vadd.f32 %v679, %v711
        %v744 = vadd.f32 %v680, %v712
        %v745 = vadd.f32 %v681, %v713
        %v746 = vadd.f32 %v682, %v714
        %v747 = vadd.f32 %v683, %v715
        %v748 = vadd.f32 %v684, %v716
        %v749 = vadd.f32 %v685, %v717
        %v750 = vadd.f32 %v686, %v718
        %v751 = vadd.f32 %v687, %v719
        %v752 = vadd.f32 %v688, %v720
        %v753 = vadd.f32 %v689, %v721
        %v754 = vmul.f32 %v622, 0.25
        %v755 = vmul.f32 %v623, 0.25
        %v756 = vmul.f32 %v624, 0.25
        %v757 = vmul.f32 %v625, 0.25
        %v758 = vadd.f32 %v722, %v630
        %v759 = vadd.f32 %v723, %v631
        %v760 = vadd.f32 %v724, %v632
        %v761 = vadd.f32 %v725, %v633
        %v762 = vadd.f32 %v726, %v634
        %v763 = vadd.f32 %v727, %v635
        %v764 = vadd.f32 %v728, %v636
        %v765 = vadd.f32 %v729, %v637
        %v766 = vadd.f32 %v730, %v638
        %v767 = vadd.f32 %v731, %v639
        %v768 = vadd.f32 %v732, %v640
        %v769 = vadd.f32 %v733, %v641
        %v770 = vadd.f32 %v734, %v642
        %v771 = vadd.f32 %v735, %v643
        %v772 = vadd.f32 %v736, %v644
        %v773 = vadd.f32 %v737, %v645
        %v774 = vadd.f32 %v738, %v646
        %v775 = vadd.f32 %v739, %v647
        %v776 = vadd.f32 %v740, %v648
        %v777 = vadd.f32 %v741, %v649
        %v778 = vadd.f32 %v742, %v650
        %v779 = vadd.f32 %v743, %v651
        %v780 = vadd.f32 %v744, %v652
        %v781 = vadd.f32 %v745, %v653
        %v782 = vadd.f32 %v746, %v654
        %v783 = vadd.f32 %v747, %v655
        %v784 = vadd.f32 %v748, %v656
        %v785 = vadd.f32 %v749, %v657
        %v786 = vadd.f32 %v750, %v754
        %v787 = vadd.f32 %v751, %v755
        %v788 = vadd.f32 %v752, %v756
        %v789 = vadd.f32 %v753, %v757
        %790 = vst.msk [vmem:[#allocation3] sm:$0xff] %vm213, 0.0
        %791 = vst.msk [vmem:[#allocation3 + $0x8] sm:$0xff] %vm213, 0.0
        %792 = vst.msk [vmem:[#allocation3 + $0x10] sm:$0x3] %vm216, 0.0
        %793 = vst.msk [vmem:[#allocation3 + $0x18] sm:$0xff] %vm213, 0.0
        %794 = vst.msk [vmem:[#allocation3 + $0x20] sm:$0xff] %vm213, 0.0
        %795 = vst.msk [vmem:[#allocation3 + $0x28] sm:$0x3] %vm216, 0.0
        %796 = vst.msk [vmem:[#allocation3 + $0x30] sm:$0xff] %vm213, 0.0
        %797 = vst.msk [vmem:[#allocation3 + $0x38] sm:$0xff] %vm213, 0.0
        %798 = vst.msk [vmem:[#allocation3 + $0x40] sm:$0x3] %vm216, 0.0
        %799 = vst.msk [vmem:[#allocation3 + $0x48] sm:$0xff] %vm213, 0.0
        %800 = vst.msk [vmem:[#allocation3 + $0x50] sm:$0xff] %vm213, 0.0
        %801 = vst.msk [vmem:[#allocation3 + $0x58] sm:$0x3] %vm216, 0.0
        %802 = vst.msk [vmem:[#allocation3 + $0x60] sm:$0xff] %vm213, 0.0
        %803 = vst.msk [vmem:[#allocation3 + $0x68] sm:$0xff] %vm213, 0.0
        %804 = vst.msk [vmem:[#allocation3 + $0x70] sm:$0x3] %vm216, 0.0
        %805 = vst.msk [vmem:[#allocation3 + $0x78] sm:$0xff] %vm213, 0.0
        %806 = vst.msk [vmem:[#allocation3 + $0x80] sm:$0xff] %vm213, 0.0
        %807 = vst.msk [vmem:[#allocation3 + $0x88] sm:$0x3] %vm216, 0.0
        %808 = vst.msk [vmem:[#allocation3 + $0x90] sm:$0xff] %vm213, 0.0
        %809 = vst.msk [vmem:[#allocation3 + $0x98] sm:$0xff] %vm213, 0.0
        %810 = vst.msk [vmem:[#allocation3 + $0xa0] sm:$0x3] %vm216, 0.0
        %811 = vst.msk [vmem:[#allocation3 + $0xa8] sm:$0xff] %vm213, 0.0
        %812 = vst.msk [vmem:[#allocation3 + $0xb0] sm:$0xff] %vm213, 0.0
        %813 = vst.msk [vmem:[#allocation3 + $0xb8] sm:$0x3] %vm216, 0.0
        %814 = vst.msk [vmem:[#allocation3 + $0xc0] sm:$0xff] %vm213, 0.0
        %815 = vst.msk [vmem:[#allocation3 + $0xc8] sm:$0xff] %vm213, 0.0
        %816 = vst.msk [vmem:[#allocation3 + $0xd0] sm:$0x3] %vm216, 0.0
        %817 = vst.msk [vmem:[#allocation3 + $0xd8] sm:$0xff] %vm213, 0.0
        %818 = vst.msk [vmem:[#allocation3 + $0xe0] sm:$0xff] %vm213, 0.0
        %819 = vst.msk [vmem:[#allocation3 + $0xe8] sm:$0x3] %vm216, 0.0
        %820 = vst.msk [vmem:[#allocation3 + $0xf0] sm:$0xff] %vm213, 0.0
        %821 = vst.msk [vmem:[#allocation3 + $0xf8] sm:$0xff] %vm213, 0.0
        %822 = vst.msk [vmem:[#allocation3 + $0x100] sm:$0x3] %vm216, 0.0
        %823 = vst.msk [vmem:[#allocation3 + $0x108] sm:$0xff] %vm213, 0.0
        %824 = vst.msk [vmem:[#allocation3 + $0x110] sm:$0xff] %vm213, 0.0
        %825 = vst.msk [vmem:[#allocation3 + $0x118] sm:$0x3] %vm216, 0.0
        %826 = vst.msk [vmem:[#allocation3 + $0x120] sm:$0xff] %vm213, 0.0
        %827 = vst.msk [vmem:[#allocation3 + $0x128] sm:$0xff] %vm213, 0.0
        %828 = vst.msk [vmem:[#allocation3 + $0x130] sm:$0x3] %vm216, 0.0
        %829 = vst.msk [vmem:[#allocation3 + $0x138] sm:$0xff] %vm213, 0.0
        %830 = vst.msk [vmem:[#allocation3 + $0x140] sm:$0xff] %vm213, 0.0
        %831 = vst.msk [vmem:[#allocation3 + $0x148] sm:$0x3] %vm216, 0.0
        %832 = vst.msk [vmem:[#allocation3 + $0x150] sm:$0xff] %vm213, 0.0
        %833 = vst.msk [vmem:[#allocation3 + $0x158] sm:$0xff] %vm213, 0.0
        %834 = vst.msk [vmem:[#allocation3 + $0x160] sm:$0x3] %vm216, 0.0
        %835 = vst.msk [vmem:[#allocation3 + $0x168] sm:$0xff] %vm213, 0.0
        %836 = vst.msk [vmem:[#allocation3 + $0x170] sm:$0xff] %vm213, 0.0
        %837 = vst.msk [vmem:[#allocation3 + $0x178] sm:$0x3] %vm216, 0.0
        %838 = vst.msk [vmem:[#allocation3 + $0x180] sm:$0xff] %vm213, 0.0
        %839 = vst.msk [vmem:[#allocation3 + $0x188] sm:$0xff] %vm213, 0.0
        %840 = vst.msk [vmem:[#allocation3 + $0x190] sm:$0x3] %vm216, 0.0
        %841 = vst.msk [vmem:[#allocation3 + $0x198] sm:$0xff] %vm213, 0.0
        %842 = vst.msk [vmem:[#allocation3 + $0x1a0] sm:$0xff] %vm213, 0.0
        %843 = vst.msk [vmem:[#allocation3 + $0x1a8] sm:$0x3] %vm216, 0.0
        %s844 = scalar_lea.vmem [#allocation3], 24
        %845 = vst.msk [vmem:[%s844 + $0x1] sm:$0xff] %vm213, %v758
        %846 = vst.msk [vmem:[%s844 + $0x9] sm:$0xff] %vm213, %v759
        %847 = vst.msk [vmem:[%s844 + $0x19] sm:$0xff] %vm213, %v760
        %848 = vst.msk [vmem:[%s844 + $0x21] sm:$0xff] %vm213, %v761
        %849 = vst.msk [vmem:[%s844 + $0x31] sm:$0xff] %vm213, %v762
        %850 = vst.msk [vmem:[%s844 + $0x39] sm:$0xff] %vm213, %v763
        %851 = vst.msk [vmem:[%s844 + $0x49] sm:$0xff] %vm213, %v764
        %852 = vst.msk [vmem:[%s844 + $0x51] sm:$0xff] %vm213, %v765
        %853 = vst.msk [vmem:[%s844 + $0x61] sm:$0xff] %vm213, %v766
        %854 = vst.msk [vmem:[%s844 + $0x69] sm:$0xff] %vm213, %v767
        %855 = vst.msk [vmem:[%s844 + $0x79] sm:$0xff] %vm213, %v768
        %856 = vst.msk [vmem:[%s844 + $0x81] sm:$0xff] %vm213, %v769
        %857 = vst.msk [vmem:[%s844 + $0x91] sm:$0xff] %vm213, %v770
        %858 = vst.msk [vmem:[%s844 + $0x99] sm:$0xff] %vm213, %v771
        %859 = vst.msk [vmem:[%s844 + $0xa9] sm:$0xff] %vm213, %v772
        %860 = vst.msk [vmem:[%s844 + $0xb1] sm:$0xff] %vm213, %v773
        %861 = vst.msk [vmem:[%s844 + $0xc1] sm:$0xff] %vm213, %v774
        %862 = vst.msk [vmem:[%s844 + $0xc9] sm:$0xff] %vm213, %v775
        %863 = vst.msk [vmem:[%s844 + $0xd9] sm:$0xff] %vm213, %v776
        %864 = vst.msk [vmem:[%s844 + $0xe1] sm:$0xff] %vm213, %v777
        %865 = vst.msk [vmem:[%s844 + $0xf1] sm:$0xff] %vm213, %v778
        %866 = vst.msk [vmem:[%s844 + $0xf9] sm:$0xff] %vm213, %v779
        %867 = vst.msk [vmem:[%s844 + $0x109] sm:$0xff] %vm213, %v780
        %868 = vst.msk [vmem:[%s844 + $0x111] sm:$0xff] %vm213, %v781
        %869 = vst.msk [vmem:[%s844 + $0x121] sm:$0xff] %vm213, %v782
        %870 = vst.msk [vmem:[%s844 + $0x129] sm:$0xff] %vm213, %v783
        %871 = vst.msk [vmem:[%s844 + $0x139] sm:$0xff] %vm213, %v784
        %872 = vst.msk [vmem:[%s844 + $0x141] sm:$0xff] %vm213, %v785
        %873 = vst.msk [vmem:[%s844 + $0x151] sm:$0xff] %vm213, %v786
        %874 = vst.msk [vmem:[%s844 + $0x159] sm:$0xff] %vm213, %v787
        %875 = vst.msk [vmem:[%s844 + $0x169] sm:$0xff] %vm213, %v788
        %876 = vst.msk [vmem:[%s844 + $0x171] sm:$0xff] %vm213, %v789
        %v877 = vld [vmem:[#allocation3] ss:$2 sm:$0xff]
        %s878 = scalar_lea.vmem [#allocation3], 48
        %v879 = vld [vmem:[%s878] ss:$2 sm:$0xff]
        %s880 = scalar_lea.vmem [#allocation3], 96
        %v881 = vld [vmem:[%s880] ss:$2 sm:$0xff]
        %s882 = scalar_lea.vmem [#allocation3], 144
        %v883 = vld [vmem:[%s882] ss:$2 sm:$0xff]
        %s884 = scalar_lea.vmem [#allocation3], 192
        %v885 = vld [vmem:[%s884] ss:$2 sm:$0xff]
        %s886 = scalar_lea.vmem [#allocation3], 240
        %v887 = vld [vmem:[%s886] ss:$2 sm:$0xff]
        %s888 = scalar_lea.vmem [#allocation3], 288
        %v889 = vld [vmem:[%s888] ss:$2 sm:$0xff]
        %s890 = scalar_lea.vmem [#allocation3], 336
        %v891 = vld [vmem:[%s890] ss:$2 sm:$0xff]
        %v892 = vld [vmem:[#allocation7] sm:$0xff]
        %v893 = vld [vmem:[#allocation7 + $0x8] sm:$0xff]
        %v894 = vld [vmem:[#allocation7 + $0x10] sm:$0xff]
        %v895 = vld [vmem:[#allocation7 + $0x18] sm:$0xff]
        %s896 = scalar_lea.vmem [#allocation3], 1
        %v897 = vld [vmem:[%s896] ss:$2 sm:$0xff]
        %s898 = scalar_lea.vmem [#allocation3], 49
        %v899 = vld [vmem:[%s898] ss:$2 sm:$0xff]
        %s900 = scalar_lea.vmem [#allocation3], 97
        %v901 = vld [vmem:[%s900] ss:$2 sm:$0xff]
        %s902 = scalar_lea.vmem [#allocation3], 145
        %v903 = vld [vmem:[%s902] ss:$2 sm:$0xff]
        %s904 = scalar_lea.vmem [#allocation3], 193
        %v905 = vld [vmem:[%s904] ss:$2 sm:$0xff]
        %s906 = scalar_lea.vmem [#allocation3], 241
        %v907 = vld [vmem:[%s906] ss:$2 sm:$0xff]
        %s908 = scalar_lea.vmem [#allocation3], 289
        %v909 = vld [vmem:[%s908] ss:$2 sm:$0xff]
        %s910 = scalar_lea.vmem [#allocation3], 337
        %v911 = vld [vmem:[%s910] ss:$2 sm:$0xff]
        %s912 = scalar_lea.vmem [#allocation7], 32
        %v913 = vld [vmem:[%s912] sm:$0xff]
        %v914 = vld [vmem:[%s912 + $0x8] sm:$0xff]
        %v915 = vld [vmem:[%s912 + $0x10] sm:$0xff]
        %v916 = vld [vmem:[%s912 + $0x18] sm:$0xff]
        %v918 = vsel %vm213, %v897, 0
        %v921 = vsel %vm213, %v899, 0
        %v924 = vsel %vm213, %v901, 0
        %v927 = vsel %vm213, %v903, 0
        %v930 = vsel %vm213, %v905, 0
        %v933 = vsel %vm213, %v907, 0
        %v936 = vsel %vm213, %v909, 0
        %v939 = vsel %vm213, %v911, 0
        %941 = vmatpush.msra.mxu0 0.0
        %942 = vmatpush.msra.mxu0 0.0
        %943 = vmatpush.msra.mxu0 0.0
        %944 = vmatpush.msra.mxu0 0.0
        %945 = vmatpush.msra.mxu0 0.0
        %946 = vmatpush.msra.mxu0 0.0
        %947 = vmatpush.msra.mxu0 0.0
        %948 = vmatpush.msra.mxu0 0.0
        %949 = vmatpush.msra.mxu0 0.0
        %950 = vmatpush.msra.mxu0 0.0
        %951 = vmatpush.msra.mxu0 0.0
        %952 = vmatpush.msra.mxu0 0.0
        %953 = vmatpush.msra.mxu0 %v916
        %954 = vmatpush.msra.mxu0 %v915
        %955 = vmatpush.msra.mxu0 %v914
        %956 = vmatpush.msra.mxu0 %v913
        %957 = vmatmul.f32.gmra.mxu0 %v918
        %v958 = vpop.f32.mrf.mxu0
        %v959 = vadd.f32 0.0, %v958
        %960 = vmatmul.f32.gmra.mxu0 %v921
        %v961 = vpop.f32.mrf.mxu0
        %v962 = vadd.f32 0.0, %v961
        %963 = vmatmul.f32.gmra.mxu0 %v924
        %v964 = vpop.f32.mrf.mxu0
        %v965 = vadd.f32 0.0, %v964
        %966 = vmatmul.f32.gmra.mxu0 %v927
        %v967 = vpop.f32.mrf.mxu0
        %v968 = vadd.f32 0.0, %v967
        %969 = vmatmul.f32.gmra.mxu0 %v930
        %v970 = vpop.f32.mrf.mxu0
        %v971 = vadd.f32 0.0, %v970
        %972 = vmatmul.f32.gmra.mxu0 %v933
        %v973 = vpop.f32.mrf.mxu0
        %v974 = vadd.f32 0.0, %v973
        %975 = vmatmul.f32.gmra.mxu0 %v936
        %v976 = vpop.f32.mrf.mxu0
        %v977 = vadd.f32 0.0, %v976
        %978 = vmatmul.f32.gmra.mxu0 %v939
        %v979 = vpop.f32.mrf.mxu0
        %v980 = vadd.f32 0.0, %v979
        %981 = vdwg.mxu0
        %v983 = vsel %vm213, %v877, 0
        %v986 = vsel %vm213, %v879, 0
        %v989 = vsel %vm213, %v881, 0
        %v992 = vsel %vm213, %v883, 0
        %v995 = vsel %vm213, %v885, 0
        %v998 = vsel %vm213, %v887, 0
        %v1001 = vsel %vm213, %v889, 0
        %v1004 = vsel %vm213, %v891, 0
        %1006 = vmatpush.msra.mxu0 0.0
        %1007 = vmatpush.msra.mxu0 0.0
        %1008 = vmatpush.msra.mxu0 0.0
        %1009 = vmatpush.msra.mxu0 0.0
        %1010 = vmatpush.msra.mxu0 0.0
        %1011 = vmatpush.msra.mxu0 0.0
        %1012 = vmatpush.msra.mxu0 0.0
        %1013 = vmatpush.msra.mxu0 0.0
        %1014 = vmatpush.msra.mxu0 0.0
        %1015 = vmatpush.msra.mxu0 0.0
        %1016 = vmatpush.msra.mxu0 0.0
        %1017 = vmatpush.msra.mxu0 0.0
        %1018 = vmatpush.msra.mxu0 %v895
        %1019 = vmatpush.msra.mxu0 %v894
        %1020 = vmatpush.msra.mxu0 %v893
        %1021 = vmatpush.msra.mxu0 %v892
        %1022 = vmatmul.f32.gmra.mxu0 %v983
        %v1023 = vpop.f32.mrf.mxu0
        %v1024 = vadd.f32 %v959, %v1023
        %1025 = vmatmul.f32.gmra.mxu0 %v986
        %v1026 = vpop.f32.mrf.mxu0
        %v1027 = vadd.f32 %v962, %v1026
        %1028 = vmatmul.f32.gmra.mxu0 %v989
        %v1029 = vpop.f32.mrf.mxu0
        %v1030 = vadd.f32 %v965, %v1029
        %1031 = vmatmul.f32.gmra.mxu0 %v992
        %v1032 = vpop.f32.mrf.mxu0
        %v1033 = vadd.f32 %v968, %v1032
        %1034 = vmatmul.f32.gmra.mxu0 %v995
        %v1035 = vpop.f32.mrf.mxu0
        %v1036 = vadd.f32 %v971, %v1035
        %1037 = vmatmul.f32.gmra.mxu0 %v998
        %v1038 = vpop.f32.mrf.mxu0
        %v1039 = vadd.f32 %v974, %v1038
        %1040 = vmatmul.f32.gmra.mxu0 %v1001
        %v1041 = vpop.f32.mrf.mxu0
        %v1042 = vadd.f32 %v977, %v1041
        %1043 = vmatmul.f32.gmra.mxu0 %v1004
        %v1044 = vpop.f32.mrf.mxu0
        %v1045 = vadd.f32 %v980, %v1044
        %1046 = vdwg.mxu0
        %s1047 = scalar_lea.vmem [#allocation3], 2
        %v1048 = vld [vmem:[%s1047] ss:$2 sm:$0xff]
        %s1049 = scalar_lea.vmem [#allocation3], 50
        %v1050 = vld [vmem:[%s1049] ss:$2 sm:$0xff]
        %s1051 = scalar_lea.vmem [#allocation3], 98
        %v1052 = vld [vmem:[%s1051] ss:$2 sm:$0xff]
        %s1053 = scalar_lea.vmem [#allocation3], 146
        %v1054 = vld [vmem:[%s1053] ss:$2 sm:$0xff]
        %s1055 = scalar_lea.vmem [#allocation3], 194
        %v1056 = vld [vmem:[%s1055] ss:$2 sm:$0xff]
        %s1057 = scalar_lea.vmem [#allocation3], 242
        %v1058 = vld [vmem:[%s1057] ss:$2 sm:$0xff]
        %s1059 = scalar_lea.vmem [#allocation3], 290
        %v1060 = vld [vmem:[%s1059] ss:$2 sm:$0xff]
        %s1061 = scalar_lea.vmem [#allocation3], 338
        %v1062 = vld [vmem:[%s1061] ss:$2 sm:$0xff]
        %s1063 = scalar_lea.vmem [#allocation7], 64
        %v1064 = vld [vmem:[%s1063] sm:$0xff]
        %v1065 = vld [vmem:[%s1063 + $0x8] sm:$0xff]
        %v1066 = vld [vmem:[%s1063 + $0x10] sm:$0xff]
        %v1067 = vld [vmem:[%s1063 + $0x18] sm:$0xff]
        %v1069 = vsel %vm213, %v1048, 0
        %v1072 = vsel %vm213, %v1050, 0
        %v1075 = vsel %vm213, %v1052, 0
        %v1078 = vsel %vm213, %v1054, 0
        %v1081 = vsel %vm213, %v1056, 0
        %v1084 = vsel %vm213, %v1058, 0
        %v1087 = vsel %vm213, %v1060, 0
        %v1090 = vsel %vm213, %v1062, 0
        %1092 = vmatpush.msra.mxu0 0.0
        %1093 = vmatpush.msra.mxu0 0.0
        %1094 = vmatpush.msra.mxu0 0.0
        %1095 = vmatpush.msra.mxu0 0.0
        %1096 = vmatpush.msra.mxu0 0.0
        %1097 = vmatpush.msra.mxu0 0.0
        %1098 = vmatpush.msra.mxu0 0.0
        %1099 = vmatpush.msra.mxu0 0.0
        %1100 = vmatpush.msra.mxu0 0.0
        %1101 = vmatpush.msra.mxu0 0.0
        %1102 = vmatpush.msra.mxu0 0.0
        %1103 = vmatpush.msra.mxu0 0.0
        %1104 = vmatpush.msra.mxu0 %v1067
        %1105 = vmatpush.msra.mxu0 %v1066
        %1106 = vmatpush.msra.mxu0 %v1065
        %1107 = vmatpush.msra.mxu0 %v1064
        %1108 = vmatmul.f32.gmra.mxu0 %v1069
        %v1109 = vpop.f32.mrf.mxu0
        %v1110 = vadd.f32 0.0, %v1109
        %1111 = vmatmul.f32.gmra.mxu0 %v1072
        %v1112 = vpop.f32.mrf.mxu0
        %v1113 = vadd.f32 0.0, %v1112
        %1114 = vmatmul.f32.gmra.mxu0 %v1075
        %v1115 = vpop.f32.mrf.mxu0
        %v1116 = vadd.f32 0.0, %v1115
        %1117 = vmatmul.f32.gmra.mxu0 %v1078
        %v1118 = vpop.f32.mrf.mxu0
        %v1119 = vadd.f32 0.0, %v1118
        %1120 = vmatmul.f32.gmra.mxu0 %v1081
        %v1121 = vpop.f32.mrf.mxu0
        %v1122 = vadd.f32 0.0, %v1121
        %1123 = vmatmul.f32.gmra.mxu0 %v1084
        %v1124 = vpop.f32.mrf.mxu0
        %v1125 = vadd.f32 0.0, %v1124
        %1126 = vmatmul.f32.gmra.mxu0 %v1087
        %v1127 = vpop.f32.mrf.mxu0
        %v1128 = vadd.f32 0.0, %v1127
        %1129 = vmatmul.f32.gmra.mxu0 %v1090
        %v1130 = vpop.f32.mrf.mxu0
        %v1131 = vadd.f32 0.0, %v1130
        %1132 = vdwg.mxu0
        %v1133 = vadd.f32 %v1024, %v1110
        %v1134 = vadd.f32 %v1027, %v1113
        %v1135 = vadd.f32 %v1030, %v1116
        %v1136 = vadd.f32 %v1033, %v1119
        %v1137 = vadd.f32 %v1036, %v1122
        %v1138 = vadd.f32 %v1039, %v1125
        %v1139 = vadd.f32 %v1042, %v1128
        %v1140 = vadd.f32 %v1045, %v1131
        %v1141 = vld [vmem:[%s844] ss:$2 sm:$0xff]
        %s1142 = scalar_lea.vmem %s844, 48 [#allocation3]
        %v1143 = vld [vmem:[%s1142] ss:$2 sm:$0xff]
        %s1144 = scalar_lea.vmem %s844, 96 [#allocation3]
        %v1145 = vld [vmem:[%s1144] ss:$2 sm:$0xff]
        %s1146 = scalar_lea.vmem %s844, 144 [#allocation3]
        %v1147 = vld [vmem:[%s1146] ss:$2 sm:$0xff]
        %s1148 = scalar_lea.vmem %s844, 192 [#allocation3]
        %v1149 = vld [vmem:[%s1148] ss:$2 sm:$0xff]
        %s1150 = scalar_lea.vmem %s844, 240 [#allocation3]
        %v1151 = vld [vmem:[%s1150] ss:$2 sm:$0xff]
        %s1152 = scalar_lea.vmem %s844, 288 [#allocation3]
        %v1153 = vld [vmem:[%s1152] ss:$2 sm:$0xff]
        %s1154 = scalar_lea.vmem %s844, 336 [#allocation3]
        %v1155 = vld [vmem:[%s1154] ss:$2 sm:$0xff]
        %s1156 = scalar_lea.vmem [#allocation7], 96
        %v1157 = vld [vmem:[%s1156] sm:$0xff]
        %v1158 = vld [vmem:[%s1156 + $0x8] sm:$0xff]
        %v1159 = vld [vmem:[%s1156 + $0x10] sm:$0xff]
        %v1160 = vld [vmem:[%s1156 + $0x18] sm:$0xff]
        %v1162 = vsel %vm213, %v1141, 0
        %v1165 = vsel %vm213, %v1143, 0
        %v1168 = vsel %vm213, %v1145, 0
        %v1171 = vsel %vm213, %v1147, 0
        %v1174 = vsel %vm213, %v1149, 0
        %v1177 = vsel %vm213, %v1151, 0
        %v1180 = vsel %vm213, %v1153, 0
        %v1183 = vsel %vm213, %v1155, 0
        %1185 = vmatpush.msra.mxu0 0.0
        %1186 = vmatpush.msra.mxu0 0.0
        %1187 = vmatpush.msra.mxu0 0.0
        %1188 = vmatpush.msra.mxu0 0.0
        %1189 = vmatpush.msra.mxu0 0.0
        %1190 = vmatpush.msra.mxu0 0.0
        %1191 = vmatpush.msra.mxu0 0.0
        %1192 = vmatpush.msra.mxu0 0.0
        %1193 = vmatpush.msra.mxu0 0.0
        %1194 = vmatpush.msra.mxu0 0.0
        %1195 = vmatpush.msra.mxu0 0.0
        %1196 = vmatpush.msra.mxu0 0.0
        %1197 = vmatpush.msra.mxu0 %v1160
        %1198 = vmatpush.msra.mxu0 %v1159
        %1199 = vmatpush.msra.mxu0 %v1158
        %1200 = vmatpush.msra.mxu0 %v1157
        %1201 = vmatmul.f32.gmra.mxu0 %v1162
        %v1202 = vpop.f32.mrf.mxu0
        %v1203 = vadd.f32 0.0, %v1202
        %1204 = vmatmul.f32.gmra.mxu0 %v1165
        %v1205 = vpop.f32.mrf.mxu0
        %v1206 = vadd.f32 0.0, %v1205
        %1207 = vmatmul.f32.gmra.mxu0 %v1168
        %v1208 = vpop.f32.mrf.mxu0
        %v1209 = vadd.f32 0.0, %v1208
        %1210 = vmatmul.f32.gmra.mxu0 %v1171
        %v1211 = vpop.f32.mrf.mxu0
        %v1212 = vadd.f32 0.0, %v1211
        %1213 = vmatmul.f32.gmra.mxu0 %v1174
        %v1214 = vpop.f32.mrf.mxu0
        %v1215 = vadd.f32 0.0, %v1214
        %1216 = vmatmul.f32.gmra.mxu0 %v1177
        %v1217 = vpop.f32.mrf.mxu0
        %v1218 = vadd.f32 0.0, %v1217
        %1219 = vmatmul.f32.gmra.mxu0 %v1180
        %v1220 = vpop.f32.mrf.mxu0
        %v1221 = vadd.f32 0.0, %v1220
        %1222 = vmatmul.f32.gmra.mxu0 %v1183
        %v1223 = vpop.f32.mrf.mxu0
        %v1224 = vadd.f32 0.0, %v1223
        %1225 = vdwg.mxu0
        %v1226 = vadd.f32 %v1133, %v1203
        %v1227 = vadd.f32 %v1134, %v1206
        %v1228 = vadd.f32 %v1135, %v1209
        %v1229 = vadd.f32 %v1136, %v1212
        %v1230 = vadd.f32 %v1137, %v1215
        %v1231 = vadd.f32 %v1138, %v1218
        %v1232 = vadd.f32 %v1139, %v1221
        %v1233 = vadd.f32 %v1140, %v1224
        %s1234 = scalar_lea.vmem %s844, 1 [#allocation3]
        %v1235 = vld [vmem:[%s1234] ss:$2 sm:$0xff]
        %s1236 = scalar_lea.vmem %s844, 49 [#allocation3]
        %v1237 = vld [vmem:[%s1236] ss:$2 sm:$0xff]
        %s1238 = scalar_lea.vmem %s844, 97 [#allocation3]
        %v1239 = vld [vmem:[%s1238] ss:$2 sm:$0xff]
        %s1240 = scalar_lea.vmem %s844, 145 [#allocation3]
        %v1241 = vld [vmem:[%s1240] ss:$2 sm:$0xff]
        %s1242 = scalar_lea.vmem %s844, 193 [#allocation3]
        %v1243 = vld [vmem:[%s1242] ss:$2 sm:$0xff]
        %s1244 = scalar_lea.vmem %s844, 241 [#allocation3]
        %v1245 = vld [vmem:[%s1244] ss:$2 sm:$0xff]
        %s1246 = scalar_lea.vmem %s844, 289 [#allocation3]
        %v1247 = vld [vmem:[%s1246] ss:$2 sm:$0xff]
        %s1248 = scalar_lea.vmem %s844, 337 [#allocation3]
        %v1249 = vld [vmem:[%s1248] ss:$2 sm:$0xff]
        %s1250 = scalar_lea.vmem [#allocation7], 128
        %v1251 = vld [vmem:[%s1250] sm:$0xff]
        %v1252 = vld [vmem:[%s1250 + $0x8] sm:$0xff]
        %v1253 = vld [vmem:[%s1250 + $0x10] sm:$0xff]
        %v1254 = vld [vmem:[%s1250 + $0x18] sm:$0xff]
        %v1256 = vsel %vm213, %v1235, 0
        %v1259 = vsel %vm213, %v1237, 0
        %v1262 = vsel %vm213, %v1239, 0
        %v1265 = vsel %vm213, %v1241, 0
        %v1268 = vsel %vm213, %v1243, 0
        %v1271 = vsel %vm213, %v1245, 0
        %v1274 = vsel %vm213, %v1247, 0
        %v1277 = vsel %vm213, %v1249, 0
        %1279 = vmatpush.msra.mxu0 0.0
        %1280 = vmatpush.msra.mxu0 0.0
        %1281 = vmatpush.msra.mxu0 0.0
        %1282 = vmatpush.msra.mxu0 0.0
        %1283 = vmatpush.msra.mxu0 0.0
        %1284 = vmatpush.msra.mxu0 0.0
        %1285 = vmatpush.msra.mxu0 0.0
        %1286 = vmatpush.msra.mxu0 0.0
        %1287 = vmatpush.msra.mxu0 0.0
        %1288 = vmatpush.msra.mxu0 0.0
        %1289 = vmatpush.msra.mxu0 0.0
        %1290 = vmatpush.msra.mxu0 0.0
        %1291 = vmatpush.msra.mxu0 %v1254
        %1292 = vmatpush.msra.mxu0 %v1253
        %1293 = vmatpush.msra.mxu0 %v1252
        %1294 = vmatpush.msra.mxu0 %v1251
        %1295 = vmatmul.f32.gmra.mxu0 %v1256
        %v1296 = vpop.f32.mrf.mxu0
        %v1297 = vadd.f32 0.0, %v1296
        %1298 = vmatmul.f32.gmra.mxu0 %v1259
        %v1299 = vpop.f32.mrf.mxu0
        %v1300 = vadd.f32 0.0, %v1299
        %1301 = vmatmul.f32.gmra.mxu0 %v1262
        %v1302 = vpop.f32.mrf.mxu0
        %v1303 = vadd.f32 0.0, %v1302
        %1304 = vmatmul.f32.gmra.mxu0 %v1265
        %v1305 = vpop.f32.mrf.mxu0
        %v1306 = vadd.f32 0.0, %v1305
        %1307 = vmatmul.f32.gmra.mxu0 %v1268
        %v1308 = vpop.f32.mrf.mxu0
        %v1309 = vadd.f32 0.0, %v1308
        %1310 = vmatmul.f32.gmra.mxu0 %v1271
        %v1311 = vpop.f32.mrf.mxu0
        %v1312 = vadd.f32 0.0, %v1311
        %1313 = vmatmul.f32.gmra.mxu0 %v1274
        %v1314 = vpop.f32.mrf.mxu0
        %v1315 = vadd.f32 0.0, %v1314
        %1316 = vmatmul.f32.gmra.mxu0 %v1277
        %v1317 = vpop.f32.mrf.mxu0
        %v1318 = vadd.f32 0.0, %v1317
        %1319 = vdwg.mxu0
        %v1320 = vadd.f32 %v1226, %v1297
        %v1321 = vadd.f32 %v1227, %v1300
        %v1322 = vadd.f32 %v1228, %v1303
        %v1323 = vadd.f32 %v1229, %v1306
        %v1324 = vadd.f32 %v1230, %v1309
        %v1325 = vadd.f32 %v1231, %v1312
        %v1326 = vadd.f32 %v1232, %v1315
        %v1327 = vadd.f32 %v1233, %v1318
        %s1328 = scalar_lea.vmem %s844, 2 [#allocation3]
        %v1329 = vld [vmem:[%s1328] ss:$2 sm:$0xff]
        %s1330 = scalar_lea.vmem %s844, 50 [#allocation3]
        %v1331 = vld [vmem:[%s1330] ss:$2 sm:$0xff]
        %s1332 = scalar_lea.vmem %s844, 98 [#allocation3]
        %v1333 = vld [vmem:[%s1332] ss:$2 sm:$0xff]
        %s1334 = scalar_lea.vmem %s844, 146 [#allocation3]
        %v1335 = vld [vmem:[%s1334] ss:$2 sm:$0xff]
        %s1336 = scalar_lea.vmem %s844, 194 [#allocation3]
        %v1337 = vld [vmem:[%s1336] ss:$2 sm:$0xff]
        %s1338 = scalar_lea.vmem %s844, 242 [#allocation3]
        %v1339 = vld [vmem:[%s1338] ss:$2 sm:$0xff]
        %s1340 = scalar_lea.vmem %s844, 290 [#allocation3]
        %v1341 = vld [vmem:[%s1340] ss:$2 sm:$0xff]
        %s1342 = scalar_lea.vmem %s844, 338 [#allocation3]
        %v1343 = vld [vmem:[%s1342] ss:$2 sm:$0xff]
        %s1344 = scalar_lea.vmem [#allocation7], 160
        %v1345 = vld [vmem:[%s1344] sm:$0xff]
        %v1346 = vld [vmem:[%s1344 + $0x8] sm:$0xff]
        %v1347 = vld [vmem:[%s1344 + $0x10] sm:$0xff]
        %v1348 = vld [vmem:[%s1344 + $0x18] sm:$0xff]
        %v1350 = vsel %vm213, %v1329, 0
        %v1353 = vsel %vm213, %v1331, 0
        %v1356 = vsel %vm213, %v1333, 0
        %v1359 = vsel %vm213, %v1335, 0
        %v1362 = vsel %vm213, %v1337, 0
        %v1365 = vsel %vm213, %v1339, 0
        %v1368 = vsel %vm213, %v1341, 0
        %v1371 = vsel %vm213, %v1343, 0
        %1373 = vmatpush.msra.mxu0 0.0
        %1374 = vmatpush.msra.mxu0 0.0
        %1375 = vmatpush.msra.mxu0 0.0
        %1376 = vmatpush.msra.mxu0 0.0
        %1377 = vmatpush.msra.mxu0 0.0
        %1378 = vmatpush.msra.mxu0 0.0
        %1379 = vmatpush.msra.mxu0 0.0
        %1380 = vmatpush.msra.mxu0 0.0
        %1381 = vmatpush.msra.mxu0 0.0
        %1382 = vmatpush.msra.mxu0 0.0
        %1383 = vmatpush.msra.mxu0 0.0
        %1384 = vmatpush.msra.mxu0 0.0
        %1385 = vmatpush.msra.mxu0 %v1348
        %1386 = vmatpush.msra.mxu0 %v1347
        %1387 = vmatpush.msra.mxu0 %v1346
        %1388 = vmatpush.msra.mxu0 %v1345
        %1389 = vmatmul.f32.gmra.mxu0 %v1350
        %v1390 = vpop.f32.mrf.mxu0
        %v1391 = vadd.f32 0.0, %v1390
        %1392 = vmatmul.f32.gmra.mxu0 %v1353
        %v1393 = vpop.f32.mrf.mxu0
        %v1394 = vadd.f32 0.0, %v1393
        %1395 = vmatmul.f32.gmra.mxu0 %v1356
        %v1396 = vpop.f32.mrf.mxu0
        %v1397 = vadd.f32 0.0, %v1396
        %1398 = vmatmul.f32.gmra.mxu0 %v1359
        %v1399 = vpop.f32.mrf.mxu0
        %v1400 = vadd.f32 0.0, %v1399
        %1401 = vmatmul.f32.gmra.mxu0 %v1362
        %v1402 = vpop.f32.mrf.mxu0
        %v1403 = vadd.f32 0.0, %v1402
        %1404 = vmatmul.f32.gmra.mxu0 %v1365
        %v1405 = vpop.f32.mrf.mxu0
        %v1406 = vadd.f32 0.0, %v1405
        %1407 = vmatmul.f32.gmra.mxu0 %v1368
        %v1408 = vpop.f32.mrf.mxu0
        %v1409 = vadd.f32 0.0, %v1408
        %1410 = vmatmul.f32.gmra.mxu0 %v1371
        %v1411 = vpop.f32.mrf.mxu0
        %v1412 = vadd.f32 0.0, %v1411
        %1413 = vdwg.mxu0
        %v1414 = vadd.f32 %v1320, %v1391
        %v1415 = vadd.f32 %v1321, %v1394
        %v1416 = vadd.f32 %v1322, %v1397
        %v1417 = vadd.f32 %v1323, %v1400
        %v1418 = vadd.f32 %v1324, %v1403
        %v1419 = vadd.f32 %v1325, %v1406
        %v1420 = vadd.f32 %v1326, %v1409
        %v1421 = vadd.f32 %v1327, %v1412
        %s1422 = scalar_lea.vmem [#allocation3], 48
        %v1423 = vld [vmem:[%s1422] ss:$2 sm:$0xff]
        %s1424 = scalar_lea.vmem %s1422, 48 [#allocation3]
        %v1425 = vld [vmem:[%s1424] ss:$2 sm:$0xff]
        %s1426 = scalar_lea.vmem %s1422, 96 [#allocation3]
        %v1427 = vld [vmem:[%s1426] ss:$2 sm:$0xff]
        %s1428 = scalar_lea.vmem %s1422, 144 [#allocation3]
        %v1429 = vld [vmem:[%s1428] ss:$2 sm:$0xff]
        %s1430 = scalar_lea.vmem %s1422, 192 [#allocation3]
        %v1431 = vld [vmem:[%s1430] ss:$2 sm:$0xff]
        %s1432 = scalar_lea.vmem %s1422, 240 [#allocation3]
        %v1433 = vld [vmem:[%s1432] ss:$2 sm:$0xff]
        %s1434 = scalar_lea.vmem %s1422, 288 [#allocation3]
        %v1435 = vld [vmem:[%s1434] ss:$2 sm:$0xff]
        %s1436 = scalar_lea.vmem %s1422, 336 [#allocation3]
        %v1437 = vld [vmem:[%s1436] ss:$2 sm:$0xff]
        %s1438 = scalar_lea.vmem [#allocation7], 192
        %v1439 = vld [vmem:[%s1438] sm:$0xff]
        %v1440 = vld [vmem:[%s1438 + $0x8] sm:$0xff]
        %v1441 = vld [vmem:[%s1438 + $0x10] sm:$0xff]
        %v1442 = vld [vmem:[%s1438 + $0x18] sm:$0xff]
        %v1444 = vsel %vm213, %v1423, 0
        %v1447 = vsel %vm213, %v1425, 0
        %v1450 = vsel %vm213, %v1427, 0
        %v1453 = vsel %vm213, %v1429, 0
        %v1456 = vsel %vm213, %v1431, 0
        %v1459 = vsel %vm213, %v1433, 0
        %v1462 = vsel %vm213, %v1435, 0
        %v1465 = vsel %vm213, %v1437, 0
        %1467 = vmatpush.msra.mxu0 0.0
        %1468 = vmatpush.msra.mxu0 0.0
        %1469 = vmatpush.msra.mxu0 0.0
        %1470 = vmatpush.msra.mxu0 0.0
        %1471 = vmatpush.msra.mxu0 0.0
        %1472 = vmatpush.msra.mxu0 0.0
        %1473 = vmatpush.msra.mxu0 0.0
        %1474 = vmatpush.msra.mxu0 0.0
        %1475 = vmatpush.msra.mxu0 0.0
        %1476 = vmatpush.msra.mxu0 0.0
        %1477 = vmatpush.msra.mxu0 0.0
        %1478 = vmatpush.msra.mxu0 0.0
        %1479 = vmatpush.msra.mxu0 %v1442
        %1480 = vmatpush.msra.mxu0 %v1441
        %1481 = vmatpush.msra.mxu0 %v1440
        %1482 = vmatpush.msra.mxu0 %v1439
        %1483 = vmatmul.f32.gmra.mxu0 %v1444
        %v1484 = vpop.f32.mrf.mxu0
        %v1485 = vadd.f32 0.0, %v1484
        %1486 = vmatmul.f32.gmra.mxu0 %v1447
        %v1487 = vpop.f32.mrf.mxu0
        %v1488 = vadd.f32 0.0, %v1487
        %1489 = vmatmul.f32.gmra.mxu0 %v1450
        %v1490 = vpop.f32.mrf.mxu0
        %v1491 = vadd.f32 0.0, %v1490
        %1492 = vmatmul.f32.gmra.mxu0 %v1453
        %v1493 = vpop.f32.mrf.mxu0
        %v1494 = vadd.f32 0.0, %v1493
        %1495 = vmatmul.f32.gmra.mxu0 %v1456
        %v1496 = vpop.f32.mrf.mxu0
        %v1497 = vadd.f32 0.0, %v1496
        %1498 = vmatmul.f32.gmra.mxu0 %v1459
        %v1499 = vpop.f32.mrf.mxu0
        %v1500 = vadd.f32 0.0, %v1499
        %1501 = vmatmul.f32.gmra.mxu0 %v1462
        %v1502 = vpop.f32.mrf.mxu0
        %v1503 = vadd.f32 0.0, %v1502
        %1504 = vmatmul.f32.gmra.mxu0 %v1465
        %v1505 = vpop.f32.mrf.mxu0
        %v1506 = vadd.f32 0.0, %v1505
        %1507 = vdwg.mxu0
        %v1508 = vadd.f32 %v1414, %v1485
        %v1509 = vadd.f32 %v1415, %v1488
        %v1510 = vadd.f32 %v1416, %v1491
        %v1511 = vadd.f32 %v1417, %v1494
        %v1512 = vadd.f32 %v1418, %v1497
        %v1513 = vadd.f32 %v1419, %v1500
        %v1514 = vadd.f32 %v1420, %v1503
        %v1515 = vadd.f32 %v1421, %v1506
        %s1516 = scalar_lea.vmem %s1422, 1 [#allocation3]
        %v1517 = vld [vmem:[%s1516] ss:$2 sm:$0xff]
        %s1518 = scalar_lea.vmem %s1422, 49 [#allocation3]
        %v1519 = vld [vmem:[%s1518] ss:$2 sm:$0xff]
        %s1520 = scalar_lea.vmem %s1422, 97 [#allocation3]
        %v1521 = vld [vmem:[%s1520] ss:$2 sm:$0xff]
        %s1522 = scalar_lea.vmem %s1422, 145 [#allocation3]
        %v1523 = vld [vmem:[%s1522] ss:$2 sm:$0xff]
        %s1524 = scalar_lea.vmem %s1422, 193 [#allocation3]
        %v1525 = vld [vmem:[%s1524] ss:$2 sm:$0xff]
        %s1526 = scalar_lea.vmem %s1422, 241 [#allocation3]
        %v1527 = vld [vmem:[%s1526] ss:$2 sm:$0xff]
        %s1528 = scalar_lea.vmem %s1422, 289 [#allocation3]
        %v1529 = vld [vmem:[%s1528] ss:$2 sm:$0xff]
        %s1530 = scalar_lea.vmem %s1422, 337 [#allocation3]
        %v1531 = vld [vmem:[%s1530] ss:$2 sm:$0xff]
        %s1532 = scalar_lea.vmem [#allocation7], 224
        %v1533 = vld [vmem:[%s1532] sm:$0xff]
        %v1534 = vld [vmem:[%s1532 + $0x8] sm:$0xff]
        %v1535 = vld [vmem:[%s1532 + $0x10] sm:$0xff]
        %v1536 = vld [vmem:[%s1532 + $0x18] sm:$0xff]
        %v1538 = vsel %vm213, %v1517, 0
        %v1541 = vsel %vm213, %v1519, 0
        %v1544 = vsel %vm213, %v1521, 0
        %v1547 = vsel %vm213, %v1523, 0
        %v1550 = vsel %vm213, %v1525, 0
        %v1553 = vsel %vm213, %v1527, 0
        %v1556 = vsel %vm213, %v1529, 0
        %v1559 = vsel %vm213, %v1531, 0
        %1561 = vmatpush.msra.mxu0 0.0
        %1562 = vmatpush.msra.mxu0 0.0
        %1563 = vmatpush.msra.mxu0 0.0
        %1564 = vmatpush.msra.mxu0 0.0
        %1565 = vmatpush.msra.mxu0 0.0
        %1566 = vmatpush.msra.mxu0 0.0
        %1567 = vmatpush.msra.mxu0 0.0
        %1568 = vmatpush.msra.mxu0 0.0
        %1569 = vmatpush.msra.mxu0 0.0
        %1570 = vmatpush.msra.mxu0 0.0
        %1571 = vmatpush.msra.mxu0 0.0
        %1572 = vmatpush.msra.mxu0 0.0
        %1573 = vmatpush.msra.mxu0 %v1536
        %1574 = vmatpush.msra.mxu0 %v1535
        %1575 = vmatpush.msra.mxu0 %v1534
        %1576 = vmatpush.msra.mxu0 %v1533
        %1577 = vmatmul.f32.gmra.mxu0 %v1538
        %v1578 = vpop.f32.mrf.mxu0
        %v1579 = vadd.f32 0.0, %v1578
        %1580 = vmatmul.f32.gmra.mxu0 %v1541
        %v1581 = vpop.f32.mrf.mxu0
        %v1582 = vadd.f32 0.0, %v1581
        %1583 = vmatmul.f32.gmra.mxu0 %v1544
        %v1584 = vpop.f32.mrf.mxu0
        %v1585 = vadd.f32 0.0, %v1584
        %1586 = vmatmul.f32.gmra.mxu0 %v1547
        %v1587 = vpop.f32.mrf.mxu0
        %v1588 = vadd.f32 0.0, %v1587
        %1589 = vmatmul.f32.gmra.mxu0 %v1550
        %v1590 = vpop.f32.mrf.mxu0
        %v1591 = vadd.f32 0.0, %v1590
        %1592 = vmatmul.f32.gmra.mxu0 %v1553
        %v1593 = vpop.f32.mrf.mxu0
        %v1594 = vadd.f32 0.0, %v1593
        %1595 = vmatmul.f32.gmra.mxu0 %v1556
        %v1596 = vpop.f32.mrf.mxu0
        %v1597 = vadd.f32 0.0, %v1596
        %1598 = vmatmul.f32.gmra.mxu0 %v1559
        %v1599 = vpop.f32.mrf.mxu0
        %v1600 = vadd.f32 0.0, %v1599
        %1601 = vdwg.mxu0
        %v1602 = vadd.f32 %v1508, %v1579
        %v1603 = vadd.f32 %v1509, %v1582
        %v1604 = vadd.f32 %v1510, %v1585
        %v1605 = vadd.f32 %v1511, %v1588
        %v1606 = vadd.f32 %v1512, %v1591
        %v1607 = vadd.f32 %v1513, %v1594
        %v1608 = vadd.f32 %v1514, %v1597
        %v1609 = vadd.f32 %v1515, %v1600
        %s1610 = scalar_lea.vmem %s1422, 2 [#allocation3]
        %v1611 = vld [vmem:[%s1610] ss:$2 sm:$0xff]
        %s1612 = scalar_lea.vmem %s1422, 50 [#allocation3]
        %v1613 = vld [vmem:[%s1612] ss:$2 sm:$0xff]
        %s1614 = scalar_lea.vmem %s1422, 98 [#allocation3]
        %v1615 = vld [vmem:[%s1614] ss:$2 sm:$0xff]
        %s1616 = scalar_lea.vmem %s1422, 146 [#allocation3]
        %v1617 = vld [vmem:[%s1616] ss:$2 sm:$0xff]
        %s1618 = scalar_lea.vmem %s1422, 194 [#allocation3]
        %v1619 = vld [vmem:[%s1618] ss:$2 sm:$0xff]
        %s1620 = scalar_lea.vmem %s1422, 242 [#allocation3]
        %v1621 = vld [vmem:[%s1620] ss:$2 sm:$0xff]
        %s1622 = scalar_lea.vmem %s1422, 290 [#allocation3]
        %v1623 = vld [vmem:[%s1622] ss:$2 sm:$0xff]
        %s1624 = scalar_lea.vmem %s1422, 338 [#allocation3]
        %v1625 = vld [vmem:[%s1624] ss:$2 sm:$0xff]
        %s1626 = scalar_lea.vmem [#allocation7], 256
        %v1627 = vld [vmem:[%s1626] sm:$0xff]
        %v1628 = vld [vmem:[%s1626 + $0x8] sm:$0xff]
        %v1629 = vld [vmem:[%s1626 + $0x10] sm:$0xff]
        %v1630 = vld [vmem:[%s1626 + $0x18] sm:$0xff]
        %v1632 = vsel %vm213, %v1611, 0
        %v1635 = vsel %vm213, %v1613, 0
        %v1638 = vsel %vm213, %v1615, 0
        %v1641 = vsel %vm213, %v1617, 0
        %v1644 = vsel %vm213, %v1619, 0
        %v1647 = vsel %vm213, %v1621, 0
        %v1650 = vsel %vm213, %v1623, 0
        %v1653 = vsel %vm213, %v1625, 0
        %1655 = vmatpush.msra.mxu0 0.0
        %1656 = vmatpush.msra.mxu0 0.0
        %1657 = vmatpush.msra.mxu0 0.0
        %1658 = vmatpush.msra.mxu0 0.0
        %1659 = vmatpush.msra.mxu0 0.0
        %1660 = vmatpush.msra.mxu0 0.0
        %1661 = vmatpush.msra.mxu0 0.0
        %1662 = vmatpush.msra.mxu0 0.0
        %1663 = vmatpush.msra.mxu0 0.0
        %1664 = vmatpush.msra.mxu0 0.0
        %1665 = vmatpush.msra.mxu0 0.0
        %1666 = vmatpush.msra.mxu0 0.0
        %1667 = vmatpush.msra.mxu0 %v1630
        %1668 = vmatpush.msra.mxu0 %v1629
        %1669 = vmatpush.msra.mxu0 %v1628
        %1670 = vmatpush.msra.mxu0 %v1627
        %1671 = vmatmul.f32.gmra.mxu0 %v1632
        %v1672 = vpop.f32.mrf.mxu0
        %v1673 = vadd.f32 0.0, %v1672
        %1674 = vmatmul.f32.gmra.mxu0 %v1635
        %v1675 = vpop.f32.mrf.mxu0
        %v1676 = vadd.f32 0.0, %v1675
        %1677 = vmatmul.f32.gmra.mxu0 %v1638
        %v1678 = vpop.f32.mrf.mxu0
        %v1679 = vadd.f32 0.0, %v1678
        %1680 = vmatmul.f32.gmra.mxu0 %v1641
        %v1681 = vpop.f32.mrf.mxu0
        %v1682 = vadd.f32 0.0, %v1681
        %1683 = vmatmul.f32.gmra.mxu0 %v1644
        %v1684 = vpop.f32.mrf.mxu0
        %v1685 = vadd.f32 0.0, %v1684
        %1686 = vmatmul.f32.gmra.mxu0 %v1647
        %v1687 = vpop.f32.mrf.mxu0
        %v1688 = vadd.f32 0.0, %v1687
        %1689 = vmatmul.f32.gmra.mxu0 %v1650
        %v1690 = vpop.f32.mrf.mxu0
        %v1691 = vadd.f32 0.0, %v1690
        %1692 = vmatmul.f32.gmra.mxu0 %v1653
        %v1693 = vpop.f32.mrf.mxu0
        %v1694 = vadd.f32 0.0, %v1693
        %1695 = vdwg.mxu0
        %v1696 = vadd.f32 %v1602, %v1673
        %v1697 = vadd.f32 %v1603, %v1676
        %v1698 = vadd.f32 %v1604, %v1679
        %v1699 = vadd.f32 %v1605, %v1682
        %v1700 = vadd.f32 %v1606, %v1685
        %v1701 = vadd.f32 %v1607, %v1688
        %v1702 = vadd.f32 %v1608, %v1691
        %v1703 = vadd.f32 %v1609, %v1694
        %vm1704 = vcmask 523264
        %1705 = vst.msk [vmem:[%s180] sm:$0xff] %vm1704, %v1696
        %1706 = vst.msk [vmem:[%s180 + $0x8] sm:$0xff] %vm1704, %v1697
        %1707 = vst.msk [vmem:[%s180 + $0x10] sm:$0xff] %vm1704, %v1698
        %1708 = vst.msk [vmem:[%s180 + $0x18] sm:$0xff] %vm1704, %v1699
        %1709 = vst.msk [vmem:[%s180 + $0x20] sm:$0xff] %vm1704, %v1700
        %1710 = vst.msk [vmem:[%s180 + $0x28] sm:$0xff] %vm1704, %v1701
        %1711 = vst.msk [vmem:[%s180 + $0x30] sm:$0xff] %vm1704, %v1702
        %1712 = vst.msk [vmem:[%s180 + $0x38] sm:$0xff] %vm1704, %v1703
        %s1713 = sand.u32 %s75, 1
        %s1714 = scalar_lea.sflag [#allocation6], %s1713
        %s1715 = sand.u32 %s75, 1
        %s1716 = smul.addr %s1715, 64
        %s1717 = scalar_lea.vmem [#allocation9], %s1716
        // Predicated region
        $region37: #{tpu_custom_call.1} parent=27 // pred_check
          %p1718 = pneg %p85
        $region38: #{tpu_custom_call.1} parent=27 // pred_check_branch
          %1720 = sbr.rel (%p1718) target = $region40
        $region39: #{tpu_custom_call.1} parent=27 // pred_region
          %1722 = vsyncadd %s1714, 0
          %s1723 = smul.addr %s20, 8
          %s1724 = smul.addr %s1723, 8
          %s1725 = scalar_lea.hbm %s2, %s1724
          %s1726 = sshll.u32 %s1717, 4
          %s1727 = int_to_ptr.vmem [resolvable:$true] %s1726
          %s1728 = sshll.u32 %s1725, 4
          %s1729 = int_to_ptr.hbm [resolvable:$true] %s1728
          %1734 = dma.vmem_to_hbm [thread:$0]  %s1727, 1024, %s1729, %s1714, 128, 128, 8
        $region40: #{tpu_custom_call.1} parent=27 // pred_fallthru
          _
      $region28: #{tpu_custom_call.1} parent=5 // pred_fallthru
        _
      %p1735 = scmp.le.s32.totalorder 2, %s15
      // Predicated region
      $region41: #{tpu_custom_call.1} parent=5 // pred_check
        %p1736 = pneg %p1735
      $region42: #{tpu_custom_call.1} parent=5 // pred_check_branch
        %1738 = sbr.rel (%p1736) target = $region44
      $region43: #{tpu_custom_call.1} parent=5 // pred_region
        %s1739 = ssub.s32 %s15, 2
        // Predicated region
        $region45: #{tpu_custom_call.1} parent=43 // pred_check
          %p1740 = pneg %p91
        $region46: #{tpu_custom_call.1} parent=43 // pred_check_branch
          %1742 = sbr.rel (%p1740) target = $region48
        $region47: #{tpu_custom_call.1} parent=43 // pred_region
          %s1743 = sand.u32 %s76, 1
          %s1744 = scalar_lea.sflag [#allocation6], %s1743
          %s1745 = sand.u32 %s76, 1
          %s1746 = smul.addr %s1745, 64
          %s1747 = scalar_lea.vmem [#allocation9], %s1746
          %1749 = dma.done %s1744, 1024
        $region48: #{tpu_custom_call.1} parent=43 // pred_fallthru
          _
      $region44: #{tpu_custom_call.1} parent=5 // pred_fallthru
        _
    $region6: #{tpu_custom_call.1} parent=1 // loop_footer
      %s19 = sadd.s32 1, %s15
    $region7: #{tpu_custom_call.1} parent=1 // loop_footer_branch
      %14 = sbr.rel target = $region3
    $region8: #{tpu_custom_call.1} parent=1 // loop_exit
      _
    %1750 = vsyncpa [#allocation5], 1
    %s1751 = scalar_lea.sflag [#allocation5], 1
    %1752 = vsyncpa %s1751, 1
    %1753 = vsyncpa [#allocation8], 1
    %1754 = vsyncpa [#allocation6], 1
    %s1755 = scalar_lea.sflag [#allocation6], 1
    %1756 = vsyncpa %s1755, 1

</llo_original>
